<compile_context>
chip_gen: v5e
topology: v5e:2x2
jax: 0.10.0
libtpu: 0.0.40
codegen_flags: <defaults>
</compile_context>

<pallas_src>
import math
from functools import partial

import jax
import jax.numpy as jnp
from jax import lax
from jax.experimental import pallas as pl
from jax.experimental.pallas import tpu as pltpu


_SQRT_2_OVER_PI = math.sqrt(2.0 / math.pi)


def _gelu_tanh(x):
    # TODO(synk): PyTorch nn.GELU() default is exact erf GELU; tanh approximation used here.
    return 0.5 * x * (1.0 + jnp.tanh(_SQRT_2_OVER_PI * (x + 0.044715 * x * x * x)))


# ----------------------------------------------------------------------------
# Data-movement glue (no compute): adaptive pooling windows and F.unfold.
# ----------------------------------------------------------------------------
def _adaptive_pool_flatten(x5, channel_depth, rs):
    """AdaptiveAvgPool3d((channel_depth, rs, rs)) over (C,H,W) of (B,S,C,H,W) + flatten."""
    B, S, C, H, W = x5.shape
    # TODO(synk): only the evenly-divisible AdaptiveAvgPool3d window case is implemented.
    assert C % channel_depth == 0 and H % rs == 0 and W % rs == 0, (
        "non-divisible adaptive pooling windows are not supported")
    fc, fh, fw = C // channel_depth, H // rs, W // rs
    x = x5.reshape(B, S, channel_depth, fc, rs, fh, rs, fw)
    x = x.mean(axis=(3, 5, 7))
    return x.reshape(B, S, channel_depth * rs * rs)


def _unfold(x, k, stride):
    """F.unfold(kernel=(k,k), stride) + rearrange 'b (c h w) l -> b l c h w'."""
    B, C, H, W = x.shape
    oh = (H - k) // stride + 1
    ow = (W - k) // stride + 1
    if stride == k:
        # non-overlapping windows (the module's case): single reshape/transpose copy
        xb = x[:, :, :oh * k, :ow * k].reshape(B, C, oh, k, ow, k)
        return xb.transpose(0, 2, 4, 1, 3, 5).reshape(B, oh * ow, C, k, k)
    # TODO(synk): overlapping-window fallback is an O(oh*ow) slice/stack gather.
    blocks = [x[:, :, i * stride:i * stride + k, j * stride:j * stride + k]
              for i in range(oh) for j in range(ow)]
    return jnp.stack(blocks, axis=1)


# ----------------------------------------------------------------------------
# Fused kernel: reducer+LN, Q / fused-KV proj, attention, out-proj+res+LN, MLP+res.
# Grid = (B,); one batch element per step, all weights VMEM-resident.
# ----------------------------------------------------------------------------
def _weed_fused_kernel(pp_ref, pb_ref,
                       w_red_ref, b_red_ref, g_ref, be_ref,
                       wq_ref, bq_ref, wkv_ref, bkv_ref,
                       wo_ref, bo_ref, wmlp_ref, bmlp_ref,
                       o_ref, attn_sc,
                       *, num_heads, eps, compute_dtype):
    E = wq_ref.shape[0]
    d = E // num_heads
    scale = 1.0 / math.sqrt(d)

    def mm(a, b):
        # bf16 (or f32) MXU operands, f32 accumulation
        return jnp.dot(a.astype(compute_dtype), b.astype(compute_dtype),
                       preferred_element_type=jnp.float32)

    gamma = g_ref[...]
    beta = be_ref[...]

    def ln(x):
        mu = jnp.mean(x, axis=-1, keepdims=True)
        c = x - mu
        var = jnp.mean(c * c, axis=-1, keepdims=True)          # biased var (PyTorch LayerNorm)
        return c * lax.rsqrt(var + eps) * gamma + beta

    # --- Patch2vec linear_reducer + shared LayerNorm (query side & key/value side) ---
    p_emb = ln(mm(pp_ref[0], w_red_ref[...]) + b_red_ref[...])   # (P, E)
    b_emb = ln(mm(pb_ref[0], w_red_ref[...]) + b_red_ref[...])   # (L, E)

    # --- attention in-projections: Q and fused K|V ---
    q = mm(p_emb, wq_ref[...]) + bq_ref[...]                     # (P, E)
    kv = mm(b_emb, wkv_ref[...]) + bkv_ref[...]                  # (L, 2E)
    k = kv[:, :E]
    v = kv[:, E:]

    # --- per-head attention; head outputs written into the (P, E) VMEM scratch ---
    for h in range(num_heads):                                   # static unroll
        qh = q[:, h * d:(h + 1) * d] * scale
        kh = k[:, h * d:(h + 1) * d]
        vh = v[:, h * d:(h + 1) * d]
        s = lax.dot_general(qh.astype(compute_dtype), kh.astype(compute_dtype),
                            (((1,), (1,)), ((), ())),
                            preferred_element_type=jnp.float32)  # (P, L), no materialized kh.T
        s = s - jnp.max(s, axis=-1, keepdims=True)               # stable softmax (f32)
        p = jnp.exp(s)
        p = p * pl.reciprocal(jnp.sum(p, axis=-1, keepdims=True), approx=True)
        attn_sc[:, h * d:(h + 1) * d] = mm(p, vh)

    attn = attn_sc[...]                                          # (P, E)

    # --- out-projection + residual + LayerNorm, then MLP(GELU) + residual ---
    res = ln(mm(attn, wo_ref[...]) + bo_ref[...] + p_emb)
    out = _gelu_tanh(mm(res, wmlp_ref[...]) + bmlp_ref[...]) + res
    o_ref[0] = out.astype(o_ref.dtype)


def weed_fused_forward(pooled_p, pooled_b,
                       w_red, b_red, gamma, beta,
                       w_q, b_q, w_kv, b_kv, w_o, b_o, w_mlp, b_mlp,
                       *, num_heads, eps=1e-5, compute_dtype=jnp.bfloat16):
    """pooled_p:(B,P,F), pooled_b:(B,L,F) -> (B,P,E)."""
    B, P, F = pooled_p.shape
    _, L, _ = pooled_b.shape
    E = w_q.shape[0]

    def _full(a):
        shape = a.shape
        return pl.BlockSpec(shape, lambda b: (0,) * len(shape))

    in_specs = [
        pl.BlockSpec((1, P, F), lambda b: (b, 0, 0)),
        pl.BlockSpec((1, L, F), lambda b: (b, 0, 0)),
        _full(w_red), _full(b_red), _full(gamma), _full(beta),
        _full(w_q), _full(b_q), _full(w_kv), _full(b_kv),
        _full(w_o), _full(b_o), _full(w_mlp), _full(b_mlp),
    ]

    flops = 2 * B * ((P + L) * F * E        # reducer
                     + P * E * E            # q proj
                     + L * E * 2 * E        # fused kv proj
                     + 2 * P * L * E        # qk^T + pv
                     + P * E * E            # out proj
                     + P * E * E)           # mlp
    transcendentals = B * (num_heads * P * L + P * E)
    bytes_accessed = 4 * (B * (P + L) * F + B * P * E
                          + F * E + 6 * E * E + 8 * E)
    cost = pl.CostEstimate(flops=flops, transcendentals=transcendentals,
                           bytes_accessed=bytes_accessed)

    return pl.pallas_call(
        partial(_weed_fused_kernel, num_heads=num_heads, eps=eps,
                compute_dtype=compute_dtype),
        out_shape=jax.ShapeDtypeStruct((B, P, E), pooled_p.dtype),
        grid=(B,),
        in_specs=in_specs,
        out_specs=pl.BlockSpec((1, P, E), lambda b: (b, 0, 0)),
        scratch_shapes=[pltpu.VMEM((P, E), jnp.float32)],
        compiler_params=pltpu.CompilerParams(
            dimension_semantics=("parallel",),       # feeds both v7x TensorCores when B >= 2
            vmem_limit_bytes=48 * 1024 * 1024,       # within the v7x 64 MiB/TC budget
        ),
        cost_estimate=cost,
    )(pooled_p, pooled_b, w_red, b_red, gamma, beta,
      w_q, b_q, w_kv, b_kv, w_o, b_o, w_mlp, b_mlp)


# ----------------------------------------------------------------------------
# Module wrapper
# ----------------------------------------------------------------------------
class WeedAttentionPallas:
    """Pallas-TPU forward of WeedAttention (key_padding_mask=None, p_drop=0 / eval path)."""

    def __init__(self, in_channels, emb_features, patch_dim, emb_patch_div, num_heads,
                 key, p_drop=0.0, compute_dtype=jnp.bfloat16):
        if emb_features % num_heads != 0:
            raise ValueError("emb_features must be divisible by num_heads")
        # TODO(synk): dropout (p_drop > 0, training mode) not implemented.
        self.in_channels = in_channels
        self.emb_features = emb_features
        self.patch_dim = patch_dim
        self.num_heads = num_heads
        self.compute_dtype = compute_dtype
        self.result_size = patch_dim // emb_patch_div
        self.channel_depth = in_channels // 4
        self.fvec = self.channel_depth * self.result_size * self.result_size

        E = emb_features
        kr = 1.0 / math.sqrt(self.fvec)
        ke = 1.0 / math.sqrt(E)
        keys = jax.random.split(key, 12)
        u = lambda k_, s, b: jax.random.uniform(k_, s, jnp.float32, -b, b)

        # Patch2vec.linear_reducer (weights stored as (in, out) = W^T)
        self.w_red, self.b_red = u(keys[0], (self.fvec, E), kr), u(keys[1], (1, E), kr)
        # shared LayerNorm
        self.gamma = jnp.ones((1, E), jnp.float32)
        self.beta = jnp.zeros((1, E), jnp.float32)
        # nn.MultiheadAttention in/out projections
        self.w_q, self.b_q = u(keys[2], (E, E), ke), u(keys[3], (1, E), ke)
        self.w_k, self.b_k = u(keys[4], (E, E), ke), u(keys[5], (1, E), ke)
        self.w_v, self.b_v = u(keys[6], (E, E), ke), u(keys[7], (1, E), ke)
        self.w_kv = jnp.concatenate([self.w_k, self.w_v], axis=1)   # fused K|V projection
        self.b_kv = jnp.concatenate([self.b_k, self.b_v], axis=1)
        self.w_o, self.b_o = u(keys[8], (E, E), ke), u(keys[9], (1, E), ke)
        # mlp: Linear -> GELU -> Dropout(p_drop)
        self.w_mlp, self.b_mlp = u(keys[10], (E, E), ke), u(keys[11], (1, E), ke)

    def __call__(self, features, patches, key_padding_mask=None):
        # TODO(synk): key_padding_mask is not implemented (default None path only).
        assert key_padding_mask is None
        blocks = _unfold(features, self.patch_dim, 16)               # (B, L, C, pd, pd)
        pooled_p = _adaptive_pool_flatten(patches, self.channel_depth, self.result_size)
        pooled_b = _adaptive_pool_flatten(blocks, self.channel_depth, self.result_size)
        return weed_fused_forward(
            pooled_p, pooled_b,
            self.w_red, self.b_red, self.gamma, self.beta,
            self.w_q, self.b_q, self.w_kv, self.b_kv,
            self.w_o, self.b_o, self.w_mlp, self.b_mlp,
            num_heads=self.num_heads, compute_dtype=self.compute_dtype)


# ----------------------------------------------------------------------------
# Pure-JAX f32 reference mirroring the PyTorch forward (for the correctness check).
# ----------------------------------------------------------------------------
def _layer_norm_ref(x, gamma, beta, eps=1e-5):
    mean = jnp.mean(x, axis=-1, keepdims=True)
    var = jnp.mean((x - mean) ** 2, axis=-1, keepdims=True)
    return (x - mean) * lax.rsqrt(var + eps) * gamma + beta


def reference_forward(mod, features, patches):
    B, P = patches.shape[:2]
    E, Hh = mod.emb_features, mod.num_heads
    d = E // Hh

    def embed(x5):
        pooled = _adaptive_pool_flatten(x5, mod.channel_depth, mod.result_size)
        e = pooled @ mod.w_red + mod.b_red
        return _layer_norm_ref(e, mod.gamma, mod.beta)

    p_emb = embed(patches)                               # (B, P, E)
    blocks = _unfold(features, mod.patch_dim, 16)
    b_emb = embed(blocks)                                # (B, L, E)

    q = p_emb @ mod.w_q + mod.b_q
    k = b_emb @ mod.w_k + mod.b_k
    v = b_emb @ mod.w_v + mod.b_v

    def split(x):
        b, s, _ = x.shape
        return x.reshape(b, s, Hh, d).transpose(0, 2, 1, 3)

    qh, kh, vh = split(q), split(k), split(v)
    s = jnp.einsum("bhqd,bhkd->bhqk", qh, kh) / math.sqrt(d)
    a = jax.nn.softmax(s, axis=-1)
    o = jnp.einsum("bhqk,bhkd->bhqd", a, vh)
    o = o.transpose(0, 2, 1, 3).reshape(B, P, E)
    o = o @ mod.w_o + mod.b_o

    res = _layer_norm_ref(o + p_emb, mod.gamma, mod.beta)
    return _gelu_tanh(res @ mod.w_mlp + mod.b_mlp) + res


if __name__ == "__main__":
    key = jax.random.PRNGKey(0)
    k_mod, k_feat, k_patch = jax.random.split(key, 3)

    B, C, Hf, Wf = 2, 4, 32, 32
    P, patch_dim, emb_patch_div = 8, 16, 4
    emb_features, num_heads = 32, 4

    features = jax.random.normal(k_feat, (B, C, Hf, Wf), jnp.float32)
    patches = jax.random.normal(k_patch, (B, P, C, patch_dim, patch_dim), jnp.float32)

    # bf16 MXU operands (production config)
    mod = WeedAttentionPallas(C, emb_features, patch_dim, emb_patch_div, num_heads, k_mod,
                              compute_dtype=jnp.bfloat16)
    out = jax.block_until_ready(mod(features, patches))
    ref = reference_forward(mod, features, patches)
    assert out.shape == (B, P, emb_features)
    # tolerance sized for bf16 matmul operands vs an f32 reference
    assert jnp.allclose(out, ref, atol=5e-2, rtol=5e-2), "bf16 kernel mismatch vs reference"

    # f32-operand variant validates kernel structure/fusion tightly
    mod_f32 = WeedAttentionPallas(C, emb_features, patch_dim, emb_patch_div, num_heads, k_mod,
                                  compute_dtype=jnp.float32)
    out32 = jax.block_until_ready(mod_f32(features, patches))
    assert jnp.allclose(out32, ref, atol=5e-3, rtol=5e-3), "f32 kernel mismatch vs reference"

    print("KERNEL_OK")
</pallas_src>

<mosaic_0001>
module attributes {stable_mosaic.version = 11 : i64} {
  func.func @_weed_fused_kernel(%arg0: i32, %arg1: memref<1x8x16xf32, #tpu.memory_space<vmem>>, %arg2: memref<1x4x16xf32, #tpu.memory_space<vmem>>, %arg3: memref<16x32xf32, #tpu.memory_space<vmem>>, %arg4: memref<1x32xf32, #tpu.memory_space<vmem>>, %arg5: memref<1x32xf32, #tpu.memory_space<vmem>>, %arg6: memref<1x32xf32, #tpu.memory_space<vmem>>, %arg7: memref<32x32xf32, #tpu.memory_space<vmem>>, %arg8: memref<1x32xf32, #tpu.memory_space<vmem>>, %arg9: memref<32x64xf32, #tpu.memory_space<vmem>>, %arg10: memref<1x64xf32, #tpu.memory_space<vmem>>, %arg11: memref<32x32xf32, #tpu.memory_space<vmem>>, %arg12: memref<1x32xf32, #tpu.memory_space<vmem>>, %arg13: memref<32x32xf32, #tpu.memory_space<vmem>>, %arg14: memref<1x32xf32, #tpu.memory_space<vmem>>, %arg15: memref<1x8x32xf32, #tpu.memory_space<vmem>>, %arg16: memref<8x32xf32, #tpu.memory_space<vmem>>) attributes {dimension_semantics = [#tpu.dimension_semantics<parallel>], iteration_bounds = array<i64: 2>, scalar_prefetch = 0 : i64, scratch_operands = 1 : i64, tpu.core_type = #tpu.core_type<tc>, window_params = [{transform_indices = @transform_0, window_bounds = array<i64: 1, 8, 16>}, {transform_indices = @transform_1, window_bounds = array<i64: 1, 4, 16>}, {pipeline_mode = #tpu.pipeline_mode<synchronous>, transform_indices = @transform_2, window_bounds = array<i64: 16, 32>}, {pipeline_mode = #tpu.pipeline_mode<synchronous>, transform_indices = @transform_3, window_bounds = array<i64: 1, 32>}, {pipeline_mode = #tpu.pipeline_mode<synchronous>, transform_indices = @transform_4, window_bounds = array<i64: 1, 32>}, {pipeline_mode = #tpu.pipeline_mode<synchronous>, transform_indices = @transform_5, window_bounds = array<i64: 1, 32>}, {pipeline_mode = #tpu.pipeline_mode<synchronous>, transform_indices = @transform_6, window_bounds = array<i64: 32, 32>}, {pipeline_mode = #tpu.pipeline_mode<synchronous>, transform_indices = @transform_7, window_bounds = array<i64: 1, 32>}, {pipeline_mode = #tpu.pipeline_mode<synchronous>, transform_indices = @transform_8, window_bounds = array<i64: 32, 64>}, {pipeline_mode = #tpu.pipeline_mode<synchronous>, transform_indices = @transform_9, window_bounds = array<i64: 1, 64>}, {pipeline_mode = #tpu.pipeline_mode<synchronous>, transform_indices = @transform_10, window_bounds = array<i64: 32, 32>}, {pipeline_mode = #tpu.pipeline_mode<synchronous>, transform_indices = @transform_11, window_bounds = array<i64: 1, 32>}, {pipeline_mode = #tpu.pipeline_mode<synchronous>, transform_indices = @transform_12, window_bounds = array<i64: 32, 32>}, {pipeline_mode = #tpu.pipeline_mode<synchronous>, transform_indices = @transform_13, window_bounds = array<i64: 1, 32>}, {transform_indices = @transform_14, window_bounds = array<i64: 1, 8, 32>}]} {
    %c0 = arith.constant 0 : index
    %c0_0 = arith.constant 0 : index
    %0 = vector.load %arg5[%c0, %c0_0] : memref<1x32xf32, #tpu.memory_space<vmem>>, vector<1x32xf32>
    %c0_1 = arith.constant 0 : index
    %c0_2 = arith.constant 0 : index
    %1 = vector.load %arg6[%c0_1, %c0_2] : memref<1x32xf32, #tpu.memory_space<vmem>>, vector<1x32xf32>
    %c0_3 = arith.constant 0 : index
    %c0_4 = arith.constant 0 : index
    %c0_5 = arith.constant 0 : index
    %2 = vector.load %arg1[%c0_3, %c0_4, %c0_5] : memref<1x8x16xf32, #tpu.memory_space<vmem>>, vector<1x8x16xf32>
    %3 = vector.shape_cast %2 : vector<1x8x16xf32> to vector<8x16xf32>
    %c0_6 = arith.constant 0 : index
    %c0_7 = arith.constant 0 : index
    %4 = vector.load %arg3[%c0_6, %c0_7] : memref<16x32xf32, #tpu.memory_space<vmem>>, vector<16x32xf32>
    %5 = arith.truncf %3 : vector<8x16xf32> to vector<8x16xbf16>
    %6 = arith.truncf %4 : vector<16x32xf32> to vector<16x32xbf16>
    %cst = arith.constant dense<0.000000e+00> : vector<8x32xf32>
    %7 = tpu.matmul %5, %6, %cst {dimension_numbers = #tpu.dot_dimension_numbers<[1], [0], [0], [1], [0, 0, 1, 1], [], []>} : vector<8x16xbf16>, vector<16x32xbf16>, vector<8x32xf32> -> vector<8x32xf32>
    %c0_8 = arith.constant 0 : index
    %c0_9 = arith.constant 0 : index
    %8 = vector.load %arg4[%c0_8, %c0_9] : memref<1x32xf32, #tpu.memory_space<vmem>>, vector<1x32xf32>
    %9 = vector.broadcast %8 : vector<1x32xf32> to vector<8x32xf32>
    %10 = arith.addf %7, %9 : vector<8x32xf32>
    %cst_10 = arith.constant dense<0.000000e+00> : vector<8xf32>
    %11 = vector.multi_reduction <add>, %10, %cst_10 [1] : vector<8x32xf32> to vector<8xf32>
    %12 = vector.shape_cast %11 : vector<8xf32> to vector<8x1xf32>
    %cst_11 = arith.constant 3.200000e+01 : f32
    %13 = vector.broadcast %cst_11 : f32 to vector<8x1xf32>
    %14 = arith.divf %12, %13 : vector<8x1xf32>
    %15 = vector.broadcast %14 : vector<8x1xf32> to vector<8x32xf32>
    %16 = arith.subf %10, %15 : vector<8x32xf32>
    %17 = arith.mulf %16, %16 : vector<8x32xf32>
    %cst_12 = arith.constant dense<0.000000e+00> : vector<8xf32>
    %18 = vector.multi_reduction <add>, %17, %cst_12 [1] : vector<8x32xf32> to vector<8xf32>
    %19 = vector.shape_cast %18 : vector<8xf32> to vector<8x1xf32>
    %cst_13 = arith.constant 3.200000e+01 : f32
    %20 = vector.broadcast %cst_13 : f32 to vector<8x1xf32>
    %21 = arith.divf %19, %20 : vector<8x1xf32>
    %cst_14 = arith.constant 9.99999974E-6 : f32
    %22 = vector.broadcast %cst_14 : f32 to vector<8x1xf32>
    %23 = arith.addf %21, %22 : vector<8x1xf32>
    %24 = math.rsqrt %23 : vector<8x1xf32>
    %25 = vector.broadcast %24 : vector<8x1xf32> to vector<8x32xf32>
    %26 = arith.mulf %16, %25 : vector<8x32xf32>
    %27 = vector.broadcast %0 : vector<1x32xf32> to vector<8x32xf32>
    %28 = arith.mulf %26, %27 : vector<8x32xf32>
    %29 = vector.broadcast %1 : vector<1x32xf32> to vector<8x32xf32>
    %30 = arith.addf %28, %29 : vector<8x32xf32>
    %c0_15 = arith.constant 0 : index
    %c0_16 = arith.constant 0 : index
    %c0_17 = arith.constant 0 : index
    %31 = vector.load %arg2[%c0_15, %c0_16, %c0_17] : memref<1x4x16xf32, #tpu.memory_space<vmem>>, vector<1x4x16xf32>
    %32 = vector.shape_cast %31 : vector<1x4x16xf32> to vector<4x16xf32>
    %c0_18 = arith.constant 0 : index
    %c0_19 = arith.constant 0 : index
    %33 = vector.load %arg3[%c0_18, %c0_19] : memref<16x32xf32, #tpu.memory_space<vmem>>, vector<16x32xf32>
    %34 = arith.truncf %32 : vector<4x16xf32> to vector<4x16xbf16>
    %35 = arith.truncf %33 : vector<16x32xf32> to vector<16x32xbf16>
    %cst_20 = arith.constant dense<0.000000e+00> : vector<4x32xf32>
    %36 = tpu.matmul %34, %35, %cst_20 {dimension_numbers = #tpu.dot_dimension_numbers<[1], [0], [0], [1], [0, 0, 1, 1], [], []>} : vector<4x16xbf16>, vector<16x32xbf16>, vector<4x32xf32> -> vector<4x32xf32>
    %c0_21 = arith.constant 0 : index
    %c0_22 = arith.constant 0 : index
    %37 = vector.load %arg4[%c0_21, %c0_22] : memref<1x32xf32, #tpu.memory_space<vmem>>, vector<1x32xf32>
    %38 = vector.broadcast %37 : vector<1x32xf32> to vector<4x32xf32>
    %39 = arith.addf %36, %38 : vector<4x32xf32>
    %cst_23 = arith.constant dense<0.000000e+00> : vector<4xf32>
    %40 = vector.multi_reduction <add>, %39, %cst_23 [1] : vector<4x32xf32> to vector<4xf32>
    %41 = vector.shape_cast %40 : vector<4xf32> to vector<4x1xf32>
    %cst_24 = arith.constant 3.200000e+01 : f32
    %42 = vector.broadcast %cst_24 : f32 to vector<4x1xf32>
    %43 = arith.divf %41, %42 : vector<4x1xf32>
    %44 = vector.broadcast %43 : vector<4x1xf32> to vector<4x32xf32>
    %45 = arith.subf %39, %44 : vector<4x32xf32>
    %46 = arith.mulf %45, %45 : vector<4x32xf32>
    %cst_25 = arith.constant dense<0.000000e+00> : vector<4xf32>
    %47 = vector.multi_reduction <add>, %46, %cst_25 [1] : vector<4x32xf32> to vector<4xf32>
    %48 = vector.shape_cast %47 : vector<4xf32> to vector<4x1xf32>
    %cst_26 = arith.constant 3.200000e+01 : f32
    %49 = vector.broadcast %cst_26 : f32 to vector<4x1xf32>
    %50 = arith.divf %48, %49 : vector<4x1xf32>
    %cst_27 = arith.constant 9.99999974E-6 : f32
    %51 = vector.broadcast %cst_27 : f32 to vector<4x1xf32>
    %52 = arith.addf %50, %51 : vector<4x1xf32>
    %53 = math.rsqrt %52 : vector<4x1xf32>
    %54 = vector.broadcast %53 : vector<4x1xf32> to vector<4x32xf32>
    %55 = arith.mulf %45, %54 : vector<4x32xf32>
    %56 = vector.broadcast %0 : vector<1x32xf32> to vector<4x32xf32>
    %57 = arith.mulf %55, %56 : vector<4x32xf32>
    %58 = vector.broadcast %1 : vector<1x32xf32> to vector<4x32xf32>
    %59 = arith.addf %57, %58 : vector<4x32xf32>
    %c0_28 = arith.constant 0 : index
    %c0_29 = arith.constant 0 : index
    %60 = vector.load %arg7[%c0_28, %c0_29] : memref<32x32xf32, #tpu.memory_space<vmem>>, vector<32x32xf32>
    %61 = arith.truncf %30 : vector<8x32xf32> to vector<8x32xbf16>
    %62 = arith.truncf %60 : vector<32x32xf32> to vector<32x32xbf16>
    %cst_30 = arith.constant dense<0.000000e+00> : vector<8x32xf32>
    %63 = tpu.matmul %61, %62, %cst_30 {dimension_numbers = #tpu.dot_dimension_numbers<[1], [0], [0], [1], [0, 0, 1, 1], [], []>} : vector<8x32xbf16>, vector<32x32xbf16>, vector<8x32xf32> -> vector<8x32xf32>
    %c0_31 = arith.constant 0 : index
    %c0_32 = arith.constant 0 : index
    %64 = vector.load %arg8[%c0_31, %c0_32] : memref<1x32xf32, #tpu.memory_space<vmem>>, vector<1x32xf32>
    %65 = vector.broadcast %64 : vector<1x32xf32> to vector<8x32xf32>
    %66 = arith.addf %63, %65 : vector<8x32xf32>
    %c0_33 = arith.constant 0 : index
    %c0_34 = arith.constant 0 : index
    %67 = vector.load %arg9[%c0_33, %c0_34] : memref<32x64xf32, #tpu.memory_space<vmem>>, vector<32x64xf32>
    %68 = arith.truncf %59 : vector<4x32xf32> to vector<4x32xbf16>
    %69 = arith.truncf %67 : vector<32x64xf32> to vector<32x64xbf16>
    %cst_35 = arith.constant dense<0.000000e+00> : vector<4x64xf32>
    %70 = tpu.matmul %68, %69, %cst_35 {dimension_numbers = #tpu.dot_dimension_numbers<[1], [0], [0], [1], [0, 0, 1, 1], [], []>} : vector<4x32xbf16>, vector<32x64xbf16>, vector<4x64xf32> -> vector<4x64xf32>
    %c0_36 = arith.constant 0 : index
    %c0_37 = arith.constant 0 : index
    %71 = vector.load %arg10[%c0_36, %c0_37] : memref<1x64xf32, #tpu.memory_space<vmem>>, vector<1x64xf32>
    %72 = vector.broadcast %71 : vector<1x64xf32> to vector<4x64xf32>
    %73 = arith.addf %70, %72 : vector<4x64xf32>
    %74 = vector.extract_strided_slice %73 {offsets = [0, 0], sizes = [4, 32], strides = [1, 1]} : vector<4x64xf32> to vector<4x32xf32>
    %75 = vector.extract_strided_slice %73 {offsets = [0, 32], sizes = [4, 32], strides = [1, 1]} : vector<4x64xf32> to vector<4x32xf32>
    %76 = vector.extract_strided_slice %66 {offsets = [0, 0], sizes = [8, 8], strides = [1, 1]} : vector<8x32xf32> to vector<8x8xf32>
    %cst_38 = arith.constant 0.353553385 : f32
    %77 = vector.broadcast %cst_38 : f32 to vector<8x8xf32>
    %78 = arith.mulf %76, %77 : vector<8x8xf32>
    %79 = vector.extract_strided_slice %74 {offsets = [0, 0], sizes = [4, 8], strides = [1, 1]} : vector<4x32xf32> to vector<4x8xf32>
    %80 = vector.extract_strided_slice %75 {offsets = [0, 0], sizes = [4, 8], strides = [1, 1]} : vector<4x32xf32> to vector<4x8xf32>
    %81 = arith.truncf %78 : vector<8x8xf32> to vector<8x8xbf16>
    %82 = arith.truncf %79 : vector<4x8xf32> to vector<4x8xbf16>
    %cst_39 = arith.constant dense<0.000000e+00> : vector<8x4xf32>
    %83 = tpu.matmul %81, %82, %cst_39 {dimension_numbers = #tpu.dot_dimension_numbers<[1], [1], [0], [0], [0, 0, 1, 0], [], []>} : vector<8x8xbf16>, vector<4x8xbf16>, vector<8x4xf32> -> vector<8x4xf32>
    %cst_40 = arith.constant dense<0xFF800000> : vector<8xf32>
    %84 = vector.multi_reduction <maximumf>, %83, %cst_40 [1] : vector<8x4xf32> to vector<8xf32>
    %85 = vector.shape_cast %84 : vector<8xf32> to vector<8x1xf32>
    %86 = vector.broadcast %85 : vector<8x1xf32> to vector<8x4xf32>
    %87 = arith.subf %83, %86 : vector<8x4xf32>
    %88 = math.exp %87 : vector<8x4xf32>
    %cst_41 = arith.constant dense<0.000000e+00> : vector<8xf32>
    %89 = vector.multi_reduction <add>, %88, %cst_41 [1] : vector<8x4xf32> to vector<8xf32>
    %90 = vector.shape_cast %89 : vector<8xf32> to vector<8x1xf32>
    %91 = tpu.reciprocal %90 {approx = true} : vector<8x1xf32> -> vector<8x1xf32>
    %92 = vector.broadcast %91 : vector<8x1xf32> to vector<8x4xf32>
    %93 = arith.mulf %88, %92 : vector<8x4xf32>
    %94 = arith.truncf %93 : vector<8x4xf32> to vector<8x4xbf16>
    %95 = arith.truncf %80 : vector<4x8xf32> to vector<4x8xbf16>
    %cst_42 = arith.constant dense<0.000000e+00> : vector<8x8xf32>
    %96 = tpu.matmul %94, %95, %cst_42 {dimension_numbers = #tpu.dot_dimension_numbers<[1], [0], [0], [1], [0, 0, 1, 1], [], []>} : vector<8x4xbf16>, vector<4x8xbf16>, vector<8x8xf32> -> vector<8x8xf32>
    %c0_43 = arith.constant 0 : index
    %c0_44 = arith.constant 0 : index
    %97 = vector.load %arg16[%c0_43, %c0_44] : memref<8x32xf32, #tpu.memory_space<vmem>>, vector<8x8xf32>
    tpu.vector_store %arg16[%c0_43, %c0_44], %96 {strides = array<i32>} : memref<8x32xf32, #tpu.memory_space<vmem>>, vector<8x8xf32>,
    %98 = vector.extract_strided_slice %66 {offsets = [0, 8], sizes = [8, 8], strides = [1, 1]} : vector<8x32xf32> to vector<8x8xf32>
    %cst_45 = arith.constant 0.353553385 : f32
    %99 = vector.broadcast %cst_45 : f32 to vector<8x8xf32>
    %100 = arith.mulf %98, %99 : vector<8x8xf32>
    %101 = vector.extract_strided_slice %74 {offsets = [0, 8], sizes = [4, 8], strides = [1, 1]} : vector<4x32xf32> to vector<4x8xf32>
    %102 = vector.extract_strided_slice %75 {offsets = [0, 8], sizes = [4, 8], strides = [1, 1]} : vector<4x32xf32> to vector<4x8xf32>
    %103 = arith.truncf %100 : vector<8x8xf32> to vector<8x8xbf16>
    %104 = arith.truncf %101 : vector<4x8xf32> to vector<4x8xbf16>
    %cst_46 = arith.constant dense<0.000000e+00> : vector<8x4xf32>
    %105 = tpu.matmul %103, %104, %cst_46 {dimension_numbers = #tpu.dot_dimension_numbers<[1], [1], [0], [0], [0, 0, 1, 0], [], []>} : vector<8x8xbf16>, vector<4x8xbf16>, vector<8x4xf32> -> vector<8x4xf32>
    %cst_47 = arith.constant dense<0xFF800000> : vector<8xf32>
    %106 = vector.multi_reduction <maximumf>, %105, %cst_47 [1] : vector<8x4xf32> to vector<8xf32>
    %107 = vector.shape_cast %106 : vector<8xf32> to vector<8x1xf32>
    %108 = vector.broadcast %107 : vector<8x1xf32> to vector<8x4xf32>
    %109 = arith.subf %105, %108 : vector<8x4xf32>
    %110 = math.exp %109 : vector<8x4xf32>
    %cst_48 = arith.constant dense<0.000000e+00> : vector<8xf32>
    %111 = vector.multi_reduction <add>, %110, %cst_48 [1] : vector<8x4xf32> to vector<8xf32>
    %112 = vector.shape_cast %111 : vector<8xf32> to vector<8x1xf32>
    %113 = tpu.reciprocal %112 {approx = true} : vector<8x1xf32> -> vector<8x1xf32>
    %114 = vector.broadcast %113 : vector<8x1xf32> to vector<8x4xf32>
    %115 = arith.mulf %110, %114 : vector<8x4xf32>
    %116 = arith.truncf %115 : vector<8x4xf32> to vector<8x4xbf16>
    %117 = arith.truncf %102 : vector<4x8xf32> to vector<4x8xbf16>
    %cst_49 = arith.constant dense<0.000000e+00> : vector<8x8xf32>
    %118 = tpu.matmul %116, %117, %cst_49 {dimension_numbers = #tpu.dot_dimension_numbers<[1], [0], [0], [1], [0, 0, 1, 1], [], []>} : vector<8x4xbf16>, vector<4x8xbf16>, vector<8x8xf32> -> vector<8x8xf32>
    %c0_50 = arith.constant 0 : index
    %c8 = arith.constant 8 : index
    %119 = vector.load %arg16[%c0_50, %c8] : memref<8x32xf32, #tpu.memory_space<vmem>>, vector<8x8xf32>
    tpu.vector_store %arg16[%c0_50, %c8], %118 {strides = array<i32>} : memref<8x32xf32, #tpu.memory_space<vmem>>, vector<8x8xf32>,
    %120 = vector.extract_strided_slice %66 {offsets = [0, 16], sizes = [8, 8], strides = [1, 1]} : vector<8x32xf32> to vector<8x8xf32>
    %cst_51 = arith.constant 0.353553385 : f32
    %121 = vector.broadcast %cst_51 : f32 to vector<8x8xf32>
    %122 = arith.mulf %120, %121 : vector<8x8xf32>
    %123 = vector.extract_strided_slice %74 {offsets = [0, 16], sizes = [4, 8], strides = [1, 1]} : vector<4x32xf32> to vector<4x8xf32>
    %124 = vector.extract_strided_slice %75 {offsets = [0, 16], sizes = [4, 8], strides = [1, 1]} : vector<4x32xf32> to vector<4x8xf32>
    %125 = arith.truncf %122 : vector<8x8xf32> to vector<8x8xbf16>
    %126 = arith.truncf %123 : vector<4x8xf32> to vector<4x8xbf16>
    %cst_52 = arith.constant dense<0.000000e+00> : vector<8x4xf32>
    %127 = tpu.matmul %125, %126, %cst_52 {dimension_numbers = #tpu.dot_dimension_numbers<[1], [1], [0], [0], [0, 0, 1, 0], [], []>} : vector<8x8xbf16>, vector<4x8xbf16>, vector<8x4xf32> -> vector<8x4xf32>
    %cst_53 = arith.constant dense<0xFF800000> : vector<8xf32>
    %128 = vector.multi_reduction <maximumf>, %127, %cst_53 [1] : vector<8x4xf32> to vector<8xf32>
    %129 = vector.shape_cast %128 : vector<8xf32> to vector<8x1xf32>
    %130 = vector.broadcast %129 : vector<8x1xf32> to vector<8x4xf32>
    %131 = arith.subf %127, %130 : vector<8x4xf32>
    %132 = math.exp %131 : vector<8x4xf32>
    %cst_54 = arith.constant dense<0.000000e+00> : vector<8xf32>
    %133 = vector.multi_reduction <add>, %132, %cst_54 [1] : vector<8x4xf32> to vector<8xf32>
    %134 = vector.shape_cast %133 : vector<8xf32> to vector<8x1xf32>
    %135 = tpu.reciprocal %134 {approx = true} : vector<8x1xf32> -> vector<8x1xf32>
    %136 = vector.broadcast %135 : vector<8x1xf32> to vector<8x4xf32>
    %137 = arith.mulf %132, %136 : vector<8x4xf32>
    %138 = arith.truncf %137 : vector<8x4xf32> to vector<8x4xbf16>
    %139 = arith.truncf %124 : vector<4x8xf32> to vector<4x8xbf16>
    %cst_55 = arith.constant dense<0.000000e+00> : vector<8x8xf32>
    %140 = tpu.matmul %138, %139, %cst_55 {dimension_numbers = #tpu.dot_dimension_numbers<[1], [0], [0], [1], [0, 0, 1, 1], [], []>} : vector<8x4xbf16>, vector<4x8xbf16>, vector<8x8xf32> -> vector<8x8xf32>
    %c0_56 = arith.constant 0 : index
    %c16 = arith.constant 16 : index
    %141 = vector.load %arg16[%c0_56, %c16] : memref<8x32xf32, #tpu.memory_space<vmem>>, vector<8x8xf32>
    tpu.vector_store %arg16[%c0_56, %c16], %140 {strides = array<i32>} : memref<8x32xf32, #tpu.memory_space<vmem>>, vector<8x8xf32>,
    %142 = vector.extract_strided_slice %66 {offsets = [0, 24], sizes = [8, 8], strides = [1, 1]} : vector<8x32xf32> to vector<8x8xf32>
    %cst_57 = arith.constant 0.353553385 : f32
    %143 = vector.broadcast %cst_57 : f32 to vector<8x8xf32>
    %144 = arith.mulf %142, %143 : vector<8x8xf32>
    %145 = vector.extract_strided_slice %74 {offsets = [0, 24], sizes = [4, 8], strides = [1, 1]} : vector<4x32xf32> to vector<4x8xf32>
    %146 = vector.extract_strided_slice %75 {offsets = [0, 24], sizes = [4, 8], strides = [1, 1]} : vector<4x32xf32> to vector<4x8xf32>
    %147 = arith.truncf %144 : vector<8x8xf32> to vector<8x8xbf16>
    %148 = arith.truncf %145 : vector<4x8xf32> to vector<4x8xbf16>
    %cst_58 = arith.constant dense<0.000000e+00> : vector<8x4xf32>
    %149 = tpu.matmul %147, %148, %cst_58 {dimension_numbers = #tpu.dot_dimension_numbers<[1], [1], [0], [0], [0, 0, 1, 0], [], []>} : vector<8x8xbf16>, vector<4x8xbf16>, vector<8x4xf32> -> vector<8x4xf32>
    %cst_59 = arith.constant dense<0xFF800000> : vector<8xf32>
    %150 = vector.multi_reduction <maximumf>, %149, %cst_59 [1] : vector<8x4xf32> to vector<8xf32>
    %151 = vector.shape_cast %150 : vector<8xf32> to vector<8x1xf32>
    %152 = vector.broadcast %151 : vector<8x1xf32> to vector<8x4xf32>
    %153 = arith.subf %149, %152 : vector<8x4xf32>
    %154 = math.exp %153 : vector<8x4xf32>
    %cst_60 = arith.constant dense<0.000000e+00> : vector<8xf32>
    %155 = vector.multi_reduction <add>, %154, %cst_60 [1] : vector<8x4xf32> to vector<8xf32>
    %156 = vector.shape_cast %155 : vector<8xf32> to vector<8x1xf32>
    %157 = tpu.reciprocal %156 {approx = true} : vector<8x1xf32> -> vector<8x1xf32>
    %158 = vector.broadcast %157 : vector<8x1xf32> to vector<8x4xf32>
    %159 = arith.mulf %154, %158 : vector<8x4xf32>
    %160 = arith.truncf %159 : vector<8x4xf32> to vector<8x4xbf16>
    %161 = arith.truncf %146 : vector<4x8xf32> to vector<4x8xbf16>
    %cst_61 = arith.constant dense<0.000000e+00> : vector<8x8xf32>
    %162 = tpu.matmul %160, %161, %cst_61 {dimension_numbers = #tpu.dot_dimension_numbers<[1], [0], [0], [1], [0, 0, 1, 1], [], []>} : vector<8x4xbf16>, vector<4x8xbf16>, vector<8x8xf32> -> vector<8x8xf32>
    %c0_62 = arith.constant 0 : index
    %c24 = arith.constant 24 : index
    %163 = vector.load %arg16[%c0_62, %c24] : memref<8x32xf32, #tpu.memory_space<vmem>>, vector<8x8xf32>
    tpu.vector_store %arg16[%c0_62, %c24], %162 {strides = array<i32>} : memref<8x32xf32, #tpu.memory_space<vmem>>, vector<8x8xf32>,
    %c0_63 = arith.constant 0 : index
    %c0_64 = arith.constant 0 : index
    %164 = vector.load %arg16[%c0_63, %c0_64] : memref<8x32xf32, #tpu.memory_space<vmem>>, vector<8x32xf32>
    %c0_65 = arith.constant 0 : index
    %c0_66 = arith.constant 0 : index
    %165 = vector.load %arg11[%c0_65, %c0_66] : memref<32x32xf32, #tpu.memory_space<vmem>>, vector<32x32xf32>
    %166 = arith.truncf %164 : vector<8x32xf32> to vector<8x32xbf16>
    %167 = arith.truncf %165 : vector<32x32xf32> to vector<32x32xbf16>
    %cst_67 = arith.constant dense<0.000000e+00> : vector<8x32xf32>
    %168 = tpu.matmul %166, %167, %cst_67 {dimension_numbers = #tpu.dot_dimension_numbers<[1], [0], [0], [1], [0, 0, 1, 1], [], []>} : vector<8x32xbf16>, vector<32x32xbf16>, vector<8x32xf32> -> vector<8x32xf32>
    %c0_68 = arith.constant 0 : index
    %c0_69 = arith.constant 0 : index
    %169 = vector.load %arg12[%c0_68, %c0_69] : memref<1x32xf32, #tpu.memory_space<vmem>>, vector<1x32xf32>
    %170 = vector.broadcast %169 : vector<1x32xf32> to vector<8x32xf32>
    %171 = arith.addf %168, %170 : vector<8x32xf32>
    %172 = arith.addf %171, %30 : vector<8x32xf32>
    %cst_70 = arith.constant dense<0.000000e+00> : vector<8xf32>
    %173 = vector.multi_reduction <add>, %172, %cst_70 [1] : vector<8x32xf32> to vector<8xf32>
    %174 = vector.shape_cast %173 : vector<8xf32> to vector<8x1xf32>
    %cst_71 = arith.constant 3.200000e+01 : f32
    %175 = vector.broadcast %cst_71 : f32 to vector<8x1xf32>
    %176 = arith.divf %174, %175 : vector<8x1xf32>
    %177 = vector.broadcast %176 : vector<8x1xf32> to vector<8x32xf32>
    %178 = arith.subf %172, %177 : vector<8x32xf32>
    %179 = arith.mulf %178, %178 : vector<8x32xf32>
    %cst_72 = arith.constant dense<0.000000e+00> : vector<8xf32>
    %180 = vector.multi_reduction <add>, %179, %cst_72 [1] : vector<8x32xf32> to vector<8xf32>
    %181 = vector.shape_cast %180 : vector<8xf32> to vector<8x1xf32>
    %cst_73 = arith.constant 3.200000e+01 : f32
    %182 = vector.broadcast %cst_73 : f32 to vector<8x1xf32>
    %183 = arith.divf %181, %182 : vector<8x1xf32>
    %cst_74 = arith.constant 9.99999974E-6 : f32
    %184 = vector.broadcast %cst_74 : f32 to vector<8x1xf32>
    %185 = arith.addf %183, %184 : vector<8x1xf32>
    %186 = math.rsqrt %185 : vector<8x1xf32>
    %187 = vector.broadcast %186 : vector<8x1xf32> to vector<8x32xf32>
    %188 = arith.mulf %178, %187 : vector<8x32xf32>
    %189 = vector.broadcast %0 : vector<1x32xf32> to vector<8x32xf32>
    %190 = arith.mulf %188, %189 : vector<8x32xf32>
    %191 = vector.broadcast %1 : vector<1x32xf32> to vector<8x32xf32>
    %192 = arith.addf %190, %191 : vector<8x32xf32>
    %c0_75 = arith.constant 0 : index
    %c0_76 = arith.constant 0 : index
    %193 = vector.load %arg13[%c0_75, %c0_76] : memref<32x32xf32, #tpu.memory_space<vmem>>, vector<32x32xf32>
    %194 = arith.truncf %192 : vector<8x32xf32> to vector<8x32xbf16>
    %195 = arith.truncf %193 : vector<32x32xf32> to vector<32x32xbf16>
    %cst_77 = arith.constant dense<0.000000e+00> : vector<8x32xf32>
    %196 = tpu.matmul %194, %195, %cst_77 {dimension_numbers = #tpu.dot_dimension_numbers<[1], [0], [0], [1], [0, 0, 1, 1], [], []>} : vector<8x32xbf16>, vector<32x32xbf16>, vector<8x32xf32> -> vector<8x32xf32>
    %c0_78 = arith.constant 0 : index
    %c0_79 = arith.constant 0 : index
    %197 = vector.load %arg14[%c0_78, %c0_79] : memref<1x32xf32, #tpu.memory_space<vmem>>, vector<1x32xf32>
    %198 = vector.broadcast %197 : vector<1x32xf32> to vector<8x32xf32>
    %199 = arith.addf %196, %198 : vector<8x32xf32>
    %cst_80 = arith.constant 5.000000e-01 : f32
    %200 = vector.broadcast %cst_80 : f32 to vector<8x32xf32>
    %201 = arith.mulf %200, %199 : vector<8x32xf32>
    %cst_81 = arith.constant 4.471500e-02 : f32
    %202 = vector.broadcast %cst_81 : f32 to vector<8x32xf32>
    %203 = arith.mulf %202, %199 : vector<8x32xf32>
    %204 = arith.mulf %203, %199 : vector<8x32xf32>
    %205 = arith.mulf %204, %199 : vector<8x32xf32>
    %206 = arith.addf %199, %205 : vector<8x32xf32>
    %cst_82 = arith.constant 0.797884583 : f32
    %207 = vector.broadcast %cst_82 : f32 to vector<8x32xf32>
    %208 = arith.mulf %207, %206 : vector<8x32xf32>
    %209 = math.tanh %208 : vector<8x32xf32>
    %cst_83 = arith.constant 1.000000e+00 : f32
    %210 = vector.broadcast %cst_83 : f32 to vector<8x32xf32>
    %211 = arith.addf %210, %209 : vector<8x32xf32>
    %212 = arith.mulf %201, %211 : vector<8x32xf32>
    %213 = arith.addf %212, %192 : vector<8x32xf32>
    %c0_84 = arith.constant 0 : index
    %c0_85 = arith.constant 0 : index
    %c0_86 = arith.constant 0 : index
    %214 = vector.load %arg15[%c0_84, %c0_85, %c0_86] : memref<1x8x32xf32, #tpu.memory_space<vmem>>, vector<1x8x32xf32>
    %215 = vector.shape_cast %214 : vector<1x8x32xf32> to vector<8x32xf32>
    %216 = vector.shape_cast %213 : vector<8x32xf32> to vector<1x8x32xf32>
    tpu.vector_store %arg15[%c0_84, %c0_85, %c0_86], %216 {strides = array<i32>} : memref<1x8x32xf32, #tpu.memory_space<vmem>>, vector<1x8x32xf32>,
    return
  }
  func.func @transform_0(%arg0: i32) -> (i32, i32, i32) {
    %c0_i32 = arith.constant 0 : i32
    %c0_i32_0 = arith.constant 0 : i32
    %c0_i32_1 = arith.constant 0 : i32
    return %arg0, %c0_i32, %c0_i32_0 : i32, i32, i32
  }
  func.func @transform_1(%arg0: i32) -> (i32, i32, i32) {
    %c0_i32 = arith.constant 0 : i32
    %c0_i32_0 = arith.constant 0 : i32
    %c0_i32_1 = arith.constant 0 : i32
    return %arg0, %c0_i32, %c0_i32_0 : i32, i32, i32
  }
  func.func @transform_2(%arg0: i32) -> (i32, i32) {
    %c0_i32 = arith.constant 0 : i32
    %c0_i32_0 = arith.constant 0 : i32
    %c0_i32_1 = arith.constant 0 : i32
    return %c0_i32, %c0_i32_0 : i32, i32
  }
  func.func @transform_3(%arg0: i32) -> (i32, i32) {
    %c0_i32 = arith.constant 0 : i32
    %c0_i32_0 = arith.constant 0 : i32
    %c0_i32_1 = arith.constant 0 : i32
    return %c0_i32, %c0_i32_0 : i32, i32
  }
  func.func @transform_4(%arg0: i32) -> (i32, i32) {
    %c0_i32 = arith.constant 0 : i32
    %c0_i32_0 = arith.constant 0 : i32
    %c0_i32_1 = arith.constant 0 : i32
    return %c0_i32, %c0_i32_0 : i32, i32
  }
  func.func @transform_5(%arg0: i32) -> (i32, i32) {
    %c0_i32 = arith.constant 0 : i32
    %c0_i32_0 = arith.constant 0 : i32
    %c0_i32_1 = arith.constant 0 : i32
    return %c0_i32, %c0_i32_0 : i32, i32
  }
  func.func @transform_6(%arg0: i32) -> (i32, i32) {
    %c0_i32 = arith.constant 0 : i32
    %c0_i32_0 = arith.constant 0 : i32
    %c0_i32_1 = arith.constant 0 : i32
    return %c0_i32, %c0_i32_0 : i32, i32
  }
  func.func @transform_7(%arg0: i32) -> (i32, i32) {
    %c0_i32 = arith.constant 0 : i32
    %c0_i32_0 = arith.constant 0 : i32
    %c0_i32_1 = arith.constant 0 : i32
    return %c0_i32, %c0_i32_0 : i32, i32
  }
  func.func @transform_8(%arg0: i32) -> (i32, i32) {
    %c0_i32 = arith.constant 0 : i32
    %c0_i32_0 = arith.constant 0 : i32
    %c0_i32_1 = arith.constant 0 : i32
    return %c0_i32, %c0_i32_0 : i32, i32
  }
  func.func @transform_9(%arg0: i32) -> (i32, i32) {
    %c0_i32 = arith.constant 0 : i32
    %c0_i32_0 = arith.constant 0 : i32
    %c0_i32_1 = arith.constant 0 : i32
    return %c0_i32, %c0_i32_0 : i32, i32
  }
  func.func @transform_10(%arg0: i32) -> (i32, i32) {
    %c0_i32 = arith.constant 0 : i32
    %c0_i32_0 = arith.constant 0 : i32
    %c0_i32_1 = arith.constant 0 : i32
    return %c0_i32, %c0_i32_0 : i32, i32
  }
  func.func @transform_11(%arg0: i32) -> (i32, i32) {
    %c0_i32 = arith.constant 0 : i32
    %c0_i32_0 = arith.constant 0 : i32
    %c0_i32_1 = arith.constant 0 : i32
    return %c0_i32, %c0_i32_0 : i32, i32
  }
  func.func @transform_12(%arg0: i32) -> (i32, i32) {
    %c0_i32 = arith.constant 0 : i32
    %c0_i32_0 = arith.constant 0 : i32
    %c0_i32_1 = arith.constant 0 : i32
    return %c0_i32, %c0_i32_0 : i32, i32
  }
  func.func @transform_13(%arg0: i32) -> (i32, i32) {
    %c0_i32 = arith.constant 0 : i32
    %c0_i32_0 = arith.constant 0 : i32
    %c0_i32_1 = arith.constant 0 : i32
    return %c0_i32, %c0_i32_0 : i32, i32
  }
  func.func @transform_14(%arg0: i32) -> (i32, i32, i32) {
    %c0_i32 = arith.constant 0 : i32
    %c0_i32_0 = arith.constant 0 : i32
    %c0_i32_1 = arith.constant 0 : i32
    return %arg0, %c0_i32, %c0_i32_0 : i32, i32, i32
  }
}

</mosaic_0001>

<llo_original>
// kernel: tpu_custom_call.1
$region0: #{tpu_custom_call.1}
  #allocation0 [shape = 'u32[]', space=smem, size = 0x4, offset = 0x4, fixed_abs, tag = 'smem constant byte address 0x4 - core index']
  #allocation1 [shape = 'u32[72,128]{1,0:T(1,128)}', space=vmem, size = 0x9000, scoped, tag = 'internal scratch']
  #allocation2 [shape = 'f32[8,32]{1,0:T(8,128)}', space=vmem, size = 0x1000, scoped, tag = 'scratch operand']
  %s0 = inlined_call_operand.hbm [shape: f32[2,8,16], index: 0, kind: input, shape index: {}]
  %s1 = inlined_call_operand.hbm [shape: f32[2,4,16], index: 1, kind: input, shape index: {}]
  %s2 = inlined_call_operand.hbm [shape: f32[16,32], index: 2, kind: input, shape index: {}]
  %s3 = inlined_call_operand.vmem [shape: f32[1,32], index: 3, kind: input, shape index: {}]
  %s4 = inlined_call_operand.vmem [shape: f32[1,32], index: 4, kind: input, shape index: {}]
  %s5 = inlined_call_operand.vmem [shape: f32[1,32], index: 5, kind: input, shape index: {}]
  %s6 = inlined_call_operand.hbm [shape: f32[32,32], index: 6, kind: input, shape index: {}]
  %s7 = inlined_call_operand.vmem [shape: f32[1,32], index: 7, kind: input, shape index: {}]
  %s8 = inlined_call_operand.hbm [shape: f32[32,64], index: 8, kind: input, shape index: {}]
  %s9 = inlined_call_operand.vmem [shape: f32[1,64], index: 9, kind: input, shape index: {}]
  %s10 = inlined_call_operand.hbm [shape: f32[32,32], index: 10, kind: input, shape index: {}]
  %s11 = inlined_call_operand.vmem [shape: f32[1,32], index: 11, kind: input, shape index: {}]
  %s12 = inlined_call_operand.hbm [shape: f32[32,32], index: 12, kind: input, shape index: {}]
  %s13 = inlined_call_operand.vmem [shape: f32[1,32], index: 13, kind: input, shape index: {}]
  %s14 = inlined_call_operand.hbm [shape: f32[2,8,32], index: 14, kind: output, shape index: {}]
  %s15 = sld [smem:[#allocation0]]
  $region117: #{tpu_custom_call.1} parent=0
    _
  %s17 = ssub.s32 1, %s15
  %s18 = scalar_select 0, %s17, %s15
  $region1: #{tpu_custom_call.1} parent=0
    #allocation3 [shape = 'u8[8192]{0}', space=vmem, size = 0x2000, scoped, tag = 'input window, operand 0']
    #allocation4 [shape = 's32[2]{0}', space=sflag, size = 0x8, scoped, tag = 'scoped memory for tpu_custom_call.1']
    #allocation5 [shape = 's32[2]{0}', space=sflag, size = 0x8, scoped, tag = 'scoped memory for tpu_custom_call.1']
    #allocation6 [shape = 'u8[4096]{0}', space=vmem, size = 0x1000, scoped, tag = 'input window, operand 1']
    #allocation7 [shape = 's32[2]{0}', space=sflag, size = 0x8, scoped, tag = 'scoped memory for tpu_custom_call.1']
    #allocation8 [shape = 'u8[8192]{0}', space=vmem, size = 0x2000, scoped, tag = 'input window, operand 2, single buffered']
    #allocation9 [shape = 'u8[16384]{0}', space=vmem, size = 0x4000, scoped, tag = 'input window, operand 6, single buffered']
    #allocation10 [shape = 's32[1]{0}', space=sflag, size = 0x4, scoped, tag = 'scoped memory for tpu_custom_call.1']
    #allocation11 [shape = 'u8[16384]{0}', space=vmem, size = 0x4000, scoped, tag = 'input window, operand 8, single buffered']
    #allocation12 [shape = 'u8[16384]{0}', space=vmem, size = 0x4000, scoped, tag = 'input window, operand 10, single buffered']
    #allocation13 [shape = 's32[1]{0}', space=sflag, size = 0x4, scoped, tag = 'scoped memory for tpu_custom_call.1']
    #allocation14 [shape = 'u8[16384]{0}', space=vmem, size = 0x4000, scoped, tag = 'input window, operand 12, single buffered']
    #allocation15 [shape = 'u8[8192]{0}', space=vmem, size = 0x2000, scoped, tag = 'output window, operand 0']
    %19 = vsyncpa [#allocation4], 0
    %s20 = scalar_lea.sflag [#allocation4], 1
    %21 = vsyncpa %s20, 0
    %22 = vsyncpa [#allocation7], 0
    %s23 = scalar_lea.sflag [#allocation7], 1
    %24 = vsyncpa %s23, 0
    %25 = vsyncpa [#allocation10], 0
    %26 = vsyncpa [#allocation13], 0
    %27 = vsyncpa [#allocation5], 0
    %s28 = scalar_lea.sflag [#allocation5], 1
    %29 = vsyncpa %s28, 0
    loop: start=0, step=1, limit=4
    $region2: #{tpu_custom_call.1} parent=1 // loop_pre_header
      _
    $region3: #{tpu_custom_call.1} parent=1 // loop_header
      %s31 = sphi 0, %s35
      %p32 = scmp.ge.s32.totalorder %s31, 4
      %s41 = sphi 0, %s43
      %s44 = sphi 0, %s41
      %s45 = sphi 0, %s44
      %s61 = sphi 0, %s45
      %s67 = sphi 0, %s69
      %s70 = sphi 0, %s67
      %s71 = sphi 0, %s70
      %s87 = sphi 0, %s71
      %s91 = sphi 0, %s91
      %s93 = sphi 0, %s91
      %s94 = sphi 0, %s93
      %s108 = sphi 0, %s94
      %s112 = sphi 0, %s112
      %s114 = sphi 0, %s112
      %s115 = sphi 0, %s114
      %s129 = sphi 0, %s115
      %s133 = sphi 0, %s133
      %s135 = sphi 0, %s133
      %s136 = sphi 0, %s135
      %s150 = sphi 0, %s136
      %s154 = sphi 0, %s154
      %s156 = sphi 0, %s154
      %s157 = sphi 0, %s156
      %s171 = sphi 0, %s157
      %s175 = sphi 0, %s175
      %s177 = sphi 0, %s175
      %s178 = sphi 0, %s177
      %s192 = sphi 0, %s178
      %s196 = sphi 0, %s196
      %s198 = sphi 0, %s196
      %s199 = sphi 0, %s198
      %s213 = sphi 0, %s199
      %s217 = sphi 0, %s217
      %s219 = sphi 0, %s217
      %s220 = sphi 0, %s219
      %s234 = sphi 0, %s220
      %s238 = sphi 0, %s238
      %s240 = sphi 0, %s238
      %s241 = sphi 0, %s240
      %s255 = sphi 0, %s241
      %s259 = sphi 0, %s259
      %s261 = sphi 0, %s259
      %s262 = sphi 0, %s261
      %s276 = sphi 0, %s262
      %s280 = sphi 0, %s280
      %s282 = sphi 0, %s280
      %s283 = sphi 0, %s282
      %s297 = sphi 0, %s283
      %s301 = sphi 0, %s301
      %s303 = sphi 0, %s301
      %s304 = sphi 0, %s303
      %s318 = sphi 0, %s304
      %s322 = sphi 0, %s322
      %s324 = sphi 0, %s322
      %s325 = sphi 0, %s324
      %s339 = sphi 0, %s325
      %s345 = sphi 0, %s347
      %s348 = sphi 0, %s345
      %s349 = sphi 0, %s348
      %s365 = sphi 0, %s349
    $region4: #{tpu_custom_call.1} parent=1 // loop_header_branch
      %34 = sbr.rel (%p32) target = $region8
    $region5: #{tpu_custom_call.1} parent=1 // loop_body
      %s36 = ssub.s32 %s31, 1
      %s37 = ssub.s32 %s31, 2
      %s38 = sadd.s32 %s31, 1
      %s39 = ssub.s32 %s31, %s38
      %p40 = scmp.eq.s32.totalorder %s39, 0
      %s42 = sadd.s32 %s41, 1
      %s43 = scalar_select %p40, %s41, %s42
      %p46 = pneg %p40
      %p47 = scmp.eq.s32.totalorder %s31, 1
      %p48 = por %p46, %p47
      %p49 = scmp.ne.s32.totalorder %s41, %s44
      %p50 = scmp.eq.s32.totalorder %s31, 0
      %p51 = por %p49, %p50
      %p52 = scmp.ne.s32.totalorder %s41, %s44
      %p53 = scmp.eq.s32.totalorder %s36, 1
      %p54 = por %p52, %p53
      %p55 = scmp.ne.s32.totalorder %s44, %s45
      %p56 = scmp.eq.s32.totalorder %s36, 0
      %p57 = por %p55, %p56
      %p58 = scmp.ne.s32.totalorder %s44, %s45
      %p59 = scmp.eq.s32.totalorder %s37, 1
      %p60 = por %p58, %p59
      %p62 = scmp.ne.s32.totalorder %s45, %s61
      %p63 = scmp.eq.s32.totalorder %s37, 0
      %p64 = por %p62, %p63
      %s65 = ssub.s32 %s31, %s38
      %p66 = scmp.eq.s32.totalorder %s65, 0
      %s68 = sadd.s32 %s67, 1
      %s69 = scalar_select %p66, %s67, %s68
      %p72 = pneg %p66
      %p73 = scmp.eq.s32.totalorder %s31, 1
      %p74 = por %p72, %p73
      %p75 = scmp.ne.s32.totalorder %s67, %s70
      %p76 = scmp.eq.s32.totalorder %s31, 0
      %p77 = por %p75, %p76
      %p78 = scmp.ne.s32.totalorder %s67, %s70
      %p79 = scmp.eq.s32.totalorder %s36, 1
      %p80 = por %p78, %p79
      %p81 = scmp.ne.s32.totalorder %s70, %s71
      %p82 = scmp.eq.s32.totalorder %s36, 0
      %p83 = por %p81, %p82
      %p84 = scmp.ne.s32.totalorder %s70, %s71
      %p85 = scmp.eq.s32.totalorder %s37, 1
      %p86 = por %p84, %p85
      %p88 = scmp.ne.s32.totalorder %s71, %s87
      %p89 = scmp.eq.s32.totalorder %s37, 0
      %p90 = por %p88, %p89
      %s92 = sadd.s32 %s91, 1
      %p95 = scmp.eq.s32.totalorder %s31, 1
      %p96 = scmp.ne.s32.totalorder %s91, %s93
      %p97 = scmp.eq.s32.totalorder %s31, 0
      %p98 = por %p96, %p97
      %p99 = scmp.ne.s32.totalorder %s91, %s93
      %p100 = scmp.eq.s32.totalorder %s36, 1
      %p101 = por %p99, %p100
      %p102 = scmp.ne.s32.totalorder %s93, %s94
      %p103 = scmp.eq.s32.totalorder %s36, 0
      %p104 = por %p102, %p103
      %p105 = scmp.ne.s32.totalorder %s93, %s94
      %p106 = scmp.eq.s32.totalorder %s37, 1
      %p107 = por %p105, %p106
      %p109 = scmp.ne.s32.totalorder %s94, %s108
      %p110 = scmp.eq.s32.totalorder %s37, 0
      %p111 = por %p109, %p110
      %s113 = sadd.s32 %s112, 1
      %p116 = scmp.eq.s32.totalorder %s31, 1
      %p117 = scmp.ne.s32.totalorder %s112, %s114
      %p118 = scmp.eq.s32.totalorder %s31, 0
      %p119 = por %p117, %p118
      %p120 = scmp.ne.s32.totalorder %s112, %s114
      %p121 = scmp.eq.s32.totalorder %s36, 1
      %p122 = por %p120, %p121
      %p123 = scmp.ne.s32.totalorder %s114, %s115
      %p124 = scmp.eq.s32.totalorder %s36, 0
      %p125 = por %p123, %p124
      %p126 = scmp.ne.s32.totalorder %s114, %s115
      %p127 = scmp.eq.s32.totalorder %s37, 1
      %p128 = por %p126, %p127
      %p130 = scmp.ne.s32.totalorder %s115, %s129
      %p131 = scmp.eq.s32.totalorder %s37, 0
      %p132 = por %p130, %p131
      %s134 = sadd.s32 %s133, 1
      %p137 = scmp.eq.s32.totalorder %s31, 1
      %p138 = scmp.ne.s32.totalorder %s133, %s135
      %p139 = scmp.eq.s32.totalorder %s31, 0
      %p140 = por %p138, %p139
      %p141 = scmp.ne.s32.totalorder %s133, %s135
      %p142 = scmp.eq.s32.totalorder %s36, 1
      %p143 = por %p141, %p142
      %p144 = scmp.ne.s32.totalorder %s135, %s136
      %p145 = scmp.eq.s32.totalorder %s36, 0
      %p146 = por %p144, %p145
      %p147 = scmp.ne.s32.totalorder %s135, %s136
      %p148 = scmp.eq.s32.totalorder %s37, 1
      %p149 = por %p147, %p148
      %p151 = scmp.ne.s32.totalorder %s136, %s150
      %p152 = scmp.eq.s32.totalorder %s37, 0
      %p153 = por %p151, %p152
      %s155 = sadd.s32 %s154, 1
      %p158 = scmp.eq.s32.totalorder %s31, 1
      %p159 = scmp.ne.s32.totalorder %s154, %s156
      %p160 = scmp.eq.s32.totalorder %s31, 0
      %p161 = por %p159, %p160
      %p162 = scmp.ne.s32.totalorder %s154, %s156
      %p163 = scmp.eq.s32.totalorder %s36, 1
      %p164 = por %p162, %p163
      %p165 = scmp.ne.s32.totalorder %s156, %s157
      %p166 = scmp.eq.s32.totalorder %s36, 0
      %p167 = por %p165, %p166
      %p168 = scmp.ne.s32.totalorder %s156, %s157
      %p169 = scmp.eq.s32.totalorder %s37, 1
      %p170 = por %p168, %p169
      %p172 = scmp.ne.s32.totalorder %s157, %s171
      %p173 = scmp.eq.s32.totalorder %s37, 0
      %p174 = por %p172, %p173
      %s176 = sadd.s32 %s175, 1
      %p179 = scmp.eq.s32.totalorder %s31, 1
      %p180 = scmp.ne.s32.totalorder %s175, %s177
      %p181 = scmp.eq.s32.totalorder %s31, 0
      %p182 = por %p180, %p181
      %p183 = scmp.ne.s32.totalorder %s175, %s177
      %p184 = scmp.eq.s32.totalorder %s36, 1
      %p185 = por %p183, %p184
      %p186 = scmp.ne.s32.totalorder %s177, %s178
      %p187 = scmp.eq.s32.totalorder %s36, 0
      %p188 = por %p186, %p187
      %p189 = scmp.ne.s32.totalorder %s177, %s178
      %p190 = scmp.eq.s32.totalorder %s37, 1
      %p191 = por %p189, %p190
      %p193 = scmp.ne.s32.totalorder %s178, %s192
      %p194 = scmp.eq.s32.totalorder %s37, 0
      %p195 = por %p193, %p194
      %s197 = sadd.s32 %s196, 1
      %p200 = scmp.eq.s32.totalorder %s31, 1
      %p201 = scmp.ne.s32.totalorder %s196, %s198
      %p202 = scmp.eq.s32.totalorder %s31, 0
      %p203 = por %p201, %p202
      %p204 = scmp.ne.s32.totalorder %s196, %s198
      %p205 = scmp.eq.s32.totalorder %s36, 1
      %p206 = por %p204, %p205
      %p207 = scmp.ne.s32.totalorder %s198, %s199
      %p208 = scmp.eq.s32.totalorder %s36, 0
      %p209 = por %p207, %p208
      %p210 = scmp.ne.s32.totalorder %s198, %s199
      %p211 = scmp.eq.s32.totalorder %s37, 1
      %p212 = por %p210, %p211
      %p214 = scmp.ne.s32.totalorder %s199, %s213
      %p215 = scmp.eq.s32.totalorder %s37, 0
      %p216 = por %p214, %p215
      %s218 = sadd.s32 %s217, 1
      %p221 = scmp.eq.s32.totalorder %s31, 1
      %p222 = scmp.ne.s32.totalorder %s217, %s219
      %p223 = scmp.eq.s32.totalorder %s31, 0
      %p224 = por %p222, %p223
      %p225 = scmp.ne.s32.totalorder %s217, %s219
      %p226 = scmp.eq.s32.totalorder %s36, 1
      %p227 = por %p225, %p226
      %p228 = scmp.ne.s32.totalorder %s219, %s220
      %p229 = scmp.eq.s32.totalorder %s36, 0
      %p230 = por %p228, %p229
      %p231 = scmp.ne.s32.totalorder %s219, %s220
      %p232 = scmp.eq.s32.totalorder %s37, 1
      %p233 = por %p231, %p232
      %p235 = scmp.ne.s32.totalorder %s220, %s234
      %p236 = scmp.eq.s32.totalorder %s37, 0
      %p237 = por %p235, %p236
      %s239 = sadd.s32 %s238, 1
      %p242 = scmp.eq.s32.totalorder %s31, 1
      %p243 = scmp.ne.s32.totalorder %s238, %s240
      %p244 = scmp.eq.s32.totalorder %s31, 0
      %p245 = por %p243, %p244
      %p246 = scmp.ne.s32.totalorder %s238, %s240
      %p247 = scmp.eq.s32.totalorder %s36, 1
      %p248 = por %p246, %p247
      %p249 = scmp.ne.s32.totalorder %s240, %s241
      %p250 = scmp.eq.s32.totalorder %s36, 0
      %p251 = por %p249, %p250
      %p252 = scmp.ne.s32.totalorder %s240, %s241
      %p253 = scmp.eq.s32.totalorder %s37, 1
      %p254 = por %p252, %p253
      %p256 = scmp.ne.s32.totalorder %s241, %s255
      %p257 = scmp.eq.s32.totalorder %s37, 0
      %p258 = por %p256, %p257
      %s260 = sadd.s32 %s259, 1
      %p263 = scmp.eq.s32.totalorder %s31, 1
      %p264 = scmp.ne.s32.totalorder %s259, %s261
      %p265 = scmp.eq.s32.totalorder %s31, 0
      %p266 = por %p264, %p265
      %p267 = scmp.ne.s32.totalorder %s259, %s261
      %p268 = scmp.eq.s32.totalorder %s36, 1
      %p269 = por %p267, %p268
      %p270 = scmp.ne.s32.totalorder %s261, %s262
      %p271 = scmp.eq.s32.totalorder %s36, 0
      %p272 = por %p270, %p271
      %p273 = scmp.ne.s32.totalorder %s261, %s262
      %p274 = scmp.eq.s32.totalorder %s37, 1
      %p275 = por %p273, %p274
      %p277 = scmp.ne.s32.totalorder %s262, %s276
      %p278 = scmp.eq.s32.totalorder %s37, 0
      %p279 = por %p277, %p278
      %s281 = sadd.s32 %s280, 1
      %p284 = scmp.eq.s32.totalorder %s31, 1
      %p285 = scmp.ne.s32.totalorder %s280, %s282
      %p286 = scmp.eq.s32.totalorder %s31, 0
      %p287 = por %p285, %p286
      %p288 = scmp.ne.s32.totalorder %s280, %s282
      %p289 = scmp.eq.s32.totalorder %s36, 1
      %p290 = por %p288, %p289
      %p291 = scmp.ne.s32.totalorder %s282, %s283
      %p292 = scmp.eq.s32.totalorder %s36, 0
      %p293 = por %p291, %p292
      %p294 = scmp.ne.s32.totalorder %s282, %s283
      %p295 = scmp.eq.s32.totalorder %s37, 1
      %p296 = por %p294, %p295
      %p298 = scmp.ne.s32.totalorder %s283, %s297
      %p299 = scmp.eq.s32.totalorder %s37, 0
      %p300 = por %p298, %p299
      %s302 = sadd.s32 %s301, 1
      %p305 = scmp.eq.s32.totalorder %s31, 1
      %p306 = scmp.ne.s32.totalorder %s301, %s303
      %p307 = scmp.eq.s32.totalorder %s31, 0
      %p308 = por %p306, %p307
      %p309 = scmp.ne.s32.totalorder %s301, %s303
      %p310 = scmp.eq.s32.totalorder %s36, 1
      %p311 = por %p309, %p310
      %p312 = scmp.ne.s32.totalorder %s303, %s304
      %p313 = scmp.eq.s32.totalorder %s36, 0
      %p314 = por %p312, %p313
      %p315 = scmp.ne.s32.totalorder %s303, %s304
      %p316 = scmp.eq.s32.totalorder %s37, 1
      %p317 = por %p315, %p316
      %p319 = scmp.ne.s32.totalorder %s304, %s318
      %p320 = scmp.eq.s32.totalorder %s37, 0
      %p321 = por %p319, %p320
      %s323 = sadd.s32 %s322, 1
      %p326 = scmp.eq.s32.totalorder %s31, 1
      %p327 = scmp.ne.s32.totalorder %s322, %s324
      %p328 = scmp.eq.s32.totalorder %s31, 0
      %p329 = por %p327, %p328
      %p330 = scmp.ne.s32.totalorder %s322, %s324
      %p331 = scmp.eq.s32.totalorder %s36, 1
      %p332 = por %p330, %p331
      %p333 = scmp.ne.s32.totalorder %s324, %s325
      %p334 = scmp.eq.s32.totalorder %s36, 0
      %p335 = por %p333, %p334
      %p336 = scmp.ne.s32.totalorder %s324, %s325
      %p337 = scmp.eq.s32.totalorder %s37, 1
      %p338 = por %p336, %p337
      %p340 = scmp.ne.s32.totalorder %s325, %s339
      %p341 = scmp.eq.s32.totalorder %s37, 0
      %p342 = por %p340, %p341
      %s343 = ssub.s32 %s31, %s38
      %p344 = scmp.eq.s32.totalorder %s343, 0
      %s346 = sadd.s32 %s345, 1
      %s347 = scalar_select %p344, %s345, %s346
      %p350 = pneg %p344
      %p351 = scmp.eq.s32.totalorder %s31, 1
      %p352 = por %p350, %p351
      %p353 = scmp.ne.s32.totalorder %s345, %s348
      %p354 = scmp.eq.s32.totalorder %s31, 0
      %p355 = por %p353, %p354
      %p356 = scmp.ne.s32.totalorder %s345, %s348
      %p357 = scmp.eq.s32.totalorder %s36, 1
      %p358 = por %p356, %p357
      %p359 = scmp.ne.s32.totalorder %s348, %s349
      %p360 = scmp.eq.s32.totalorder %s36, 0
      %p361 = por %p359, %p360
      %p362 = scmp.ne.s32.totalorder %s348, %s349
      %p363 = scmp.eq.s32.totalorder %s37, 1
      %p364 = por %p362, %p363
      %p366 = scmp.ne.s32.totalorder %s349, %s365
      %p367 = scmp.eq.s32.totalorder %s37, 0
      %p368 = por %p366, %p367
      %p369 = scmp.le.s32.totalorder 1, %s31
      %p370 = scmp.lt.s32.totalorder %s31, 3
      %p371 = pnand %p369, %p370
      %p372 = pneg %p371
      // Predicated region
      $region9: #{tpu_custom_call.1} parent=5 // pred_check
        _
      $region10: #{tpu_custom_call.1} parent=5 // pred_check_branch
        %374 = sbr.rel (%p371) target = $region12
      $region11: #{tpu_custom_call.1} parent=5 // pred_region
        %s375 = ssub.s32 %s31, 1
        // Predicated region
        $region13: #{tpu_custom_call.1} parent=11 // pred_check
          %p376 = pneg %p104
        $region14: #{tpu_custom_call.1} parent=11 // pred_check_branch
          %378 = sbr.rel (%p376) target = $region16
        $region15: #{tpu_custom_call.1} parent=11 // pred_region
          %380 = vsyncadd [#allocation7], 0
          %s381 = sshll.u32 %s2, 4
          %s382 = int_to_ptr.hbm [resolvable:$true] %s381
          %s383 = sshll.u32 [#allocation8], 4
          %s384 = int_to_ptr.vmem [resolvable:$true] %s383
          %389 = dma.hbm_to_vmem [thread:$0]  %s382, 256, %s384, [#allocation7], 128, 128, 8
        $region16: #{tpu_custom_call.1} parent=11 // pred_fallthru
          _
        // Predicated region
        $region17: #{tpu_custom_call.1} parent=11 // pred_check
          %p390 = pneg %p125
        $region18: #{tpu_custom_call.1} parent=11 // pred_check_branch
          %392 = sbr.rel (%p390) target = $region20
        $region19: #{tpu_custom_call.1} parent=11 // pred_region
          _
        $region20: #{tpu_custom_call.1} parent=11 // pred_fallthru
          _
        // Predicated region
        $region21: #{tpu_custom_call.1} parent=11 // pred_check
          %p393 = pneg %p146
        $region22: #{tpu_custom_call.1} parent=11 // pred_check_branch
          %395 = sbr.rel (%p393) target = $region24
        $region23: #{tpu_custom_call.1} parent=11 // pred_region
          _
        $region24: #{tpu_custom_call.1} parent=11 // pred_fallthru
          _
        // Predicated region
        $region25: #{tpu_custom_call.1} parent=11 // pred_check
          %p396 = pneg %p167
        $region26: #{tpu_custom_call.1} parent=11 // pred_check_branch
          %398 = sbr.rel (%p396) target = $region28
        $region27: #{tpu_custom_call.1} parent=11 // pred_region
          _
        $region28: #{tpu_custom_call.1} parent=11 // pred_fallthru
          _
        // Predicated region
        $region29: #{tpu_custom_call.1} parent=11 // pred_check
          %p399 = pneg %p188
        $region30: #{tpu_custom_call.1} parent=11 // pred_check_branch
          %401 = sbr.rel (%p399) target = $region32
        $region31: #{tpu_custom_call.1} parent=11 // pred_region
          %403 = vsyncadd [#allocation10], 0
          %s404 = sshll.u32 %s6, 4
          %s405 = int_to_ptr.hbm [resolvable:$true] %s404
          %s406 = sshll.u32 [#allocation9], 4
          %s407 = int_to_ptr.vmem [resolvable:$true] %s406
          %412 = dma.hbm_to_vmem [thread:$0]  %s405, 512, %s407, [#allocation10], 128, 128, 8
        $region32: #{tpu_custom_call.1} parent=11 // pred_fallthru
          _
        // Predicated region
        $region33: #{tpu_custom_call.1} parent=11 // pred_check
          %p413 = pneg %p209
        $region34: #{tpu_custom_call.1} parent=11 // pred_check_branch
          %415 = sbr.rel (%p413) target = $region36
        $region35: #{tpu_custom_call.1} parent=11 // pred_region
          _
        $region36: #{tpu_custom_call.1} parent=11 // pred_fallthru
          _
        // Predicated region
        $region37: #{tpu_custom_call.1} parent=11 // pred_check
          %p416 = pneg %p230
        $region38: #{tpu_custom_call.1} parent=11 // pred_check_branch
          %418 = sbr.rel (%p416) target = $region40
        $region39: #{tpu_custom_call.1} parent=11 // pred_region
          %420 = vsyncadd [#allocation10], 0
          %s421 = sshll.u32 %s8, 4
          %s422 = int_to_ptr.hbm [resolvable:$true] %s421
          %s423 = sshll.u32 [#allocation11], 4
          %s424 = int_to_ptr.vmem [resolvable:$true] %s423
          %429 = dma.hbm_to_vmem [thread:$0]  %s422, 512, %s424, [#allocation10], 128, 128, 8
        $region40: #{tpu_custom_call.1} parent=11 // pred_fallthru
          _
        // Predicated region
        $region41: #{tpu_custom_call.1} parent=11 // pred_check
          %p430 = pneg %p251
        $region42: #{tpu_custom_call.1} parent=11 // pred_check_branch
          %432 = sbr.rel (%p430) target = $region44
        $region43: #{tpu_custom_call.1} parent=11 // pred_region
          _
        $region44: #{tpu_custom_call.1} parent=11 // pred_fallthru
          _
        // Predicated region
        $region45: #{tpu_custom_call.1} parent=11 // pred_check
          %p433 = pneg %p272
        $region46: #{tpu_custom_call.1} parent=11 // pred_check_branch
          %435 = sbr.rel (%p433) target = $region48
        $region47: #{tpu_custom_call.1} parent=11 // pred_region
          %437 = vsyncadd [#allocation13], 0
          %s438 = sshll.u32 %s10, 4
          %s439 = int_to_ptr.hbm [resolvable:$true] %s438
          %s440 = sshll.u32 [#allocation12], 4
          %s441 = int_to_ptr.vmem [resolvable:$true] %s440
          %446 = dma.hbm_to_vmem [thread:$0]  %s439, 512, %s441, [#allocation13], 128, 128, 8
        $region48: #{tpu_custom_call.1} parent=11 // pred_fallthru
          _
        // Predicated region
        $region49: #{tpu_custom_call.1} parent=11 // pred_check
          %p447 = pneg %p293
        $region50: #{tpu_custom_call.1} parent=11 // pred_check_branch
          %449 = sbr.rel (%p447) target = $region52
        $region51: #{tpu_custom_call.1} parent=11 // pred_region
          _
        $region52: #{tpu_custom_call.1} parent=11 // pred_fallthru
          _
        // Predicated region
        $region53: #{tpu_custom_call.1} parent=11 // pred_check
          %p450 = pneg %p314
        $region54: #{tpu_custom_call.1} parent=11 // pred_check_branch
          %452 = sbr.rel (%p450) target = $region56
        $region55: #{tpu_custom_call.1} parent=11 // pred_region
          %454 = vsyncadd [#allocation13], 0
          %s455 = sshll.u32 %s12, 4
          %s456 = int_to_ptr.hbm [resolvable:$true] %s455
          %s457 = sshll.u32 [#allocation14], 4
          %s458 = int_to_ptr.vmem [resolvable:$true] %s457
          %463 = dma.hbm_to_vmem [thread:$0]  %s456, 512, %s458, [#allocation13], 128, 128, 8
        $region56: #{tpu_custom_call.1} parent=11 // pred_fallthru
          _
        // Predicated region
        $region57: #{tpu_custom_call.1} parent=11 // pred_check
          %p464 = pneg %p335
        $region58: #{tpu_custom_call.1} parent=11 // pred_check_branch
          %466 = sbr.rel (%p464) target = $region60
        $region59: #{tpu_custom_call.1} parent=11 // pred_region
          _
        $region60: #{tpu_custom_call.1} parent=11 // pred_fallthru
          _
      $region12: #{tpu_custom_call.1} parent=5 // pred_fallthru
        _
      %p467 = scmp.lt.s32.totalorder %s31, 2
      // Predicated region
      $region61: #{tpu_custom_call.1} parent=5 // pred_check
        %p468 = pneg %p467
      $region62: #{tpu_custom_call.1} parent=5 // pred_check_branch
        %470 = sbr.rel (%p468) target = $region64
      $region63: #{tpu_custom_call.1} parent=5 // pred_region
        // Predicated region
        $region65: #{tpu_custom_call.1} parent=63 // pred_check
          %p471 = pneg %p51
        $region66: #{tpu_custom_call.1} parent=63 // pred_check_branch
          %473 = sbr.rel (%p471) target = $region68
        $region67: #{tpu_custom_call.1} parent=63 // pred_region
          %s474 = sand.u32 %s41, 1
          %s475 = scalar_lea.sflag [#allocation4], %s474
          %s476 = sand.u32 %s41, 1
          %s477 = smul.addr %s476, 8
          %s478 = scalar_lea.vmem [#allocation3], %s477
          %480 = vsyncadd %s475, 0
          %s481 = smul.addr %s31, 8
          %s482 = scalar_lea.hbm %s0, %s481
          %s484 = sshll.u32 %s482, 4
          %s485 = int_to_ptr.hbm [resolvable:$true] %s484
          %s486 = sshll.u32 %s478, 4
          %s487 = int_to_ptr.vmem [resolvable:$true] %s486
          %489 = dma.hbm_to_vmem [thread:$0]  %s485, 128, %s487, %s475
        $region68: #{tpu_custom_call.1} parent=63 // pred_fallthru
          _
        // Predicated region
        $region69: #{tpu_custom_call.1} parent=63 // pred_check
          %p490 = pneg %p77
        $region70: #{tpu_custom_call.1} parent=63 // pred_check_branch
          %492 = sbr.rel (%p490) target = $region72
        $region71: #{tpu_custom_call.1} parent=63 // pred_region
          %s493 = sand.u32 %s31, 1
          %s494 = scalar_lea.sflag [#allocation7], %s493
          %s495 = sand.u32 %s67, 1
          %s496 = smul.addr %s495, 4
          %s497 = scalar_lea.vmem [#allocation6], %s496
          %499 = vsyncadd %s494, 0
          %s500 = smul.addr %s31, 4
          %s501 = scalar_lea.hbm %s1, %s500
          %s503 = sshll.u32 %s501, 4
          %s504 = int_to_ptr.hbm [resolvable:$true] %s503
          %s505 = sshll.u32 %s497, 4
          %s506 = int_to_ptr.vmem [resolvable:$true] %s505
          %508 = dma.hbm_to_vmem [thread:$0]  %s504, 64, %s506, %s494
        $region72: #{tpu_custom_call.1} parent=63 // pred_fallthru
          _
      $region64: #{tpu_custom_call.1} parent=5 // pred_fallthru
        _
      %p509 = scmp.le.s32.totalorder 1, %s31
      %p510 = scmp.lt.s32.totalorder %s31, 3
      %p511 = pnand %p509, %p510
      %p512 = pneg %p511
      // Predicated region
      $region73: #{tpu_custom_call.1} parent=5 // pred_check
        _
      $region74: #{tpu_custom_call.1} parent=5 // pred_check_branch
        %514 = sbr.rel (%p511) target = $region76
      $region75: #{tpu_custom_call.1} parent=5 // pred_region
        %s515 = ssub.s32 %s31, 1
        %s516 = sand.u32 %s44, 1
        %s517 = scalar_lea.sflag [#allocation4], %s516
        %s518 = sand.u32 %s44, 1
        %s519 = smul.addr %s518, 8
        %s520 = scalar_lea.vmem [#allocation3], %s519
        // Predicated region
        $region77: #{tpu_custom_call.1} parent=75 // pred_check
          %p521 = pneg %p57
        $region78: #{tpu_custom_call.1} parent=75 // pred_check_branch
          %523 = sbr.rel (%p521) target = $region80
        $region79: #{tpu_custom_call.1} parent=75 // pred_region
          %525 = dma.done %s517, 128
        $region80: #{tpu_custom_call.1} parent=75 // pred_fallthru
          _
        %s526 = sand.u32 %s36, 1
        %s527 = scalar_lea.sflag [#allocation7], %s526
        %s528 = sand.u32 %s70, 1
        %s529 = smul.addr %s528, 4
        %s530 = scalar_lea.vmem [#allocation6], %s529
        // Predicated region
        $region81: #{tpu_custom_call.1} parent=75 // pred_check
          %p531 = pneg %p83
        $region82: #{tpu_custom_call.1} parent=75 // pred_check_branch
          %533 = sbr.rel (%p531) target = $region84
        $region83: #{tpu_custom_call.1} parent=75 // pred_region
          %535 = dma.done %s527, 64
        $region84: #{tpu_custom_call.1} parent=75 // pred_fallthru
          _
        // Predicated region
        $region85: #{tpu_custom_call.1} parent=75 // pred_check
          %p536 = pneg %p104
        $region86: #{tpu_custom_call.1} parent=75 // pred_check_branch
          %538 = sbr.rel (%p536) target = $region88
        $region87: #{tpu_custom_call.1} parent=75 // pred_region
          %540 = dma.done [#allocation7], 256
        $region88: #{tpu_custom_call.1} parent=75 // pred_fallthru
          _
        // Predicated region
        $region89: #{tpu_custom_call.1} parent=75 // pred_check
          %p541 = pneg %p188
        $region90: #{tpu_custom_call.1} parent=75 // pred_check_branch
          %543 = sbr.rel (%p541) target = $region92
        $region91: #{tpu_custom_call.1} parent=75 // pred_region
          %545 = dma.done [#allocation10], 512
        $region92: #{tpu_custom_call.1} parent=75 // pred_fallthru
          _
        // Predicated region
        $region93: #{tpu_custom_call.1} parent=75 // pred_check
          %p546 = pneg %p230
        $region94: #{tpu_custom_call.1} parent=75 // pred_check_branch
          %548 = sbr.rel (%p546) target = $region96
        $region95: #{tpu_custom_call.1} parent=75 // pred_region
          %550 = dma.done [#allocation10], 512
        $region96: #{tpu_custom_call.1} parent=75 // pred_fallthru
          _
        // Predicated region
        $region97: #{tpu_custom_call.1} parent=75 // pred_check
          %p551 = pneg %p272
        $region98: #{tpu_custom_call.1} parent=75 // pred_check_branch
          %553 = sbr.rel (%p551) target = $region100
        $region99: #{tpu_custom_call.1} parent=75 // pred_region
          %555 = dma.done [#allocation13], 512
        $region100: #{tpu_custom_call.1} parent=75 // pred_fallthru
          _
        // Predicated region
        $region101: #{tpu_custom_call.1} parent=75 // pred_check
          %p556 = pneg %p314
        $region102: #{tpu_custom_call.1} parent=75 // pred_check_branch
          %558 = sbr.rel (%p556) target = $region104
        $region103: #{tpu_custom_call.1} parent=75 // pred_region
          %560 = dma.done [#allocation13], 512
        $region104: #{tpu_custom_call.1} parent=75 // pred_fallthru
          _
        %s561 = sand.u32 %s44, 1
        %s562 = scalar_lea.sflag [#allocation4], %s561
        %s563 = sand.u32 %s44, 1
        %s564 = smul.addr %s563, 8
        %s565 = scalar_lea.vmem [#allocation3], %s564
        %p566 = pneg %p57
        %p567 = pneg %p54
        %s568 = sand.u32 %s36, 1
        %s569 = scalar_lea.sflag [#allocation7], %s568
        %s570 = sand.u32 %s70, 1
        %s571 = smul.addr %s570, 4
        %s572 = scalar_lea.vmem [#allocation6], %s571
        %p573 = pneg %p83
        %p574 = pneg %p80
        %p575 = pneg %p104
        %p576 = pneg %p101
        %p577 = pneg %p125
        %p578 = pneg %p122
        %p579 = pneg %p146
        %p580 = pneg %p143
        %p581 = pneg %p167
        %p582 = pneg %p164
        %p583 = pneg %p188
        %p584 = pneg %p185
        %p585 = pneg %p209
        %p586 = pneg %p206
        %p587 = pneg %p230
        %p588 = pneg %p227
        %p589 = pneg %p251
        %p590 = pneg %p248
        %p591 = pneg %p272
        %p592 = pneg %p269
        %p593 = pneg %p293
        %p594 = pneg %p290
        %p595 = pneg %p314
        %p596 = pneg %p311
        %p597 = pneg %p335
        %p598 = pneg %p332
        %p599 = pneg %p361
        %p600 = pneg %p358
        %s601 = sand.u32 %s348, 1
        %s602 = scalar_lea.sflag [#allocation5], %s601
        %s603 = sand.u32 %s348, 1
        %s604 = smul.addr %s603, 8
        %s605 = scalar_lea.vmem [#allocation15], %s604
        %v607 = vld [vmem:[%s4] sm:$0x1]
        %v608 = vld [vmem:[%s5] sm:$0x1]
        %v609 = vld [vmem:[%s520] sm:$0xff]
        %v610 = vld [vmem:[#allocation8] sm:$0xff]
        %v611 = vld [vmem:[#allocation8 + $0x8] sm:$0xff]
        %v612 = vpack.c.bf16 %v609, %v609
        %v613 = vpack.c.bf16 %v611, %v610
        %v614 = vld [vmem:[%s3] sm:$0x1]
        %v616 = vperm.slane %v614, 0
        %vm618 = vcmask 130048
        %v620 = vsel %vm618, %v612, 0
        %622 = vmatpush.bf16.msra.mxu0 0
        %623 = vmatpush.bf16.msra.mxu0 0
        %624 = vmatpush.bf16.msra.mxu0 0
        %625 = vmatpush.bf16.msra.mxu0 0
        %626 = vmatpush.bf16.msra.mxu0 0
        %627 = vmatpush.bf16.msra.mxu0 0
        %628 = vmatpush.bf16.msra.mxu0 0
        %629 = vmatpush.bf16.msra.mxu0 %v613
        %630 = vmatmul.bf16.gmra.mxu0 %v620
        %v631 = vpop.f32.mrf.mxu0
        %v632 = vadd.f32 %v616, %v631
        %v633 = vpop.f32.mrf.mxu0
        %634 = vdwg.mxu0
        %vm635 = vcmask 261120
        %v636 = vsel %vm635, %v632, 0.0
        %637 = vadd.xlane.f32.xlu0 %v636
        %v638 = vpop.xlane.xlu0 %637
        %v639 = vrcp.pop 32.0
        %v640 = vmul.f32 32.0, %v639
        %v641 = vsub.f32 1.0, %v640
        %v642 = vmul.f32 %v639, %v641
        %v643 = vadd.f32 %v639, %v642
        %vm644 = vweird.f32 %v639
        %v645 = vsel %vm644, %v639, %v643
        %v646 = vmul.f32 %v638, %v645
        %v647 = vsub.f32 %v632, %v646
        %v648 = vmul.f32 %v647, %v647
        %v649 = vsel %vm635, %v648, 0.0
        %650 = vadd.xlane.f32.xlu0 %v649
        %v651 = vpop.xlane.xlu0 %650
        %v652 = vmul.f32 %v651, %v645
        %v653 = vadd.f32 %v652, 1e-05
        %v654 = vrsqrt.pop %v653
        %v655 = vmul.f32 %v654, %v653
        %v656 = vmul.f32 %v655, %v654
        %v657 = vmul.f32 0.5, %v656
        %v658 = vsub.f32 1.5, %v657
        %v659 = vmul.f32 %v654, %v658
        %vm660 = vweird.f32 %v653
        %vm661 = vweird.f32 %v654
        %vm662 = vmor %vm660, %vm661
        %v663 = vsel %vm662, %v654, %v659
        %v664 = vmul.f32 %v647, %v663
        %v666 = vperm.slane %v607, 0
        %v668 = vmul.f32 %v664, %v666
        %v670 = vperm.slane %v608, 0
        %v672 = vadd.f32 %v668, %v670
        %v673 = vld [vmem:[%s530] sm:$0xf]
        %v674 = vpack.c.bf16 %v673, %v673
        %v676 = vsel %vm618, %v674, 0
        %678 = vmatpush.bf16.msra.mxu0 0
        %679 = vmatpush.bf16.msra.mxu0 0
        %680 = vmatpush.bf16.msra.mxu0 0
        %681 = vmatpush.bf16.msra.mxu0 0
        %682 = vmatpush.bf16.msra.mxu0 0
        %683 = vmatpush.bf16.msra.mxu0 0
        %684 = vmatpush.bf16.msra.mxu0 0
        %685 = vmatpush.bf16.msra.mxu0 %v613
        %686 = vmatmul.bf16.gmra.mxu0 %v676
        %v687 = vpop.f32.mrf.mxu0
        %v688 = vadd.f32 %v616, %v687
        %v689 = vpop.f32.mrf.mxu0
        %690 = vdwg.mxu0
        %vm691 = vcmask 257024
        %v692 = vsel %vm691, %v688, 0.0
        %693 = vadd.xlane.f32.xlu0 %v692
        %v694 = vpop.xlane.xlu0 %693
        %v695 = vmul.f32 %v694, %v645
        %v696 = vsub.f32 %v688, %v695
        %v697 = vmul.f32 %v696, %v696
        %v698 = vsel %vm691, %v697, 0.0
        %699 = vadd.xlane.f32.xlu0 %v698
        %v700 = vpop.xlane.xlu0 %699
        %v701 = vmul.f32 %v700, %v645
        %v702 = vadd.f32 %v701, 1e-05
        %v703 = vrsqrt.pop %v702
        %v704 = vmul.f32 %v703, %v702
        %v705 = vmul.f32 %v704, %v703
        %v706 = vmul.f32 0.5, %v705
        %v707 = vsub.f32 1.5, %v706
        %v708 = vmul.f32 %v703, %v707
        %vm709 = vweird.f32 %v702
        %vm710 = vweird.f32 %v703
        %vm711 = vmor %vm709, %vm710
        %v712 = vsel %vm711, %v703, %v708
        %v713 = vmul.f32 %v696, %v712
        %v714 = vmul.f32 %v713, %v666
        %v715 = vadd.f32 %v714, %v670
        %v716 = vld [vmem:[#allocation9] sm:$0xff]
        %v717 = vld [vmem:[#allocation9 + $0x8] sm:$0xff]
        %v718 = vld [vmem:[#allocation9 + $0x10] sm:$0xff]
        %v719 = vld [vmem:[#allocation9 + $0x18] sm:$0xff]
        %v720 = vpack.c.bf16 %v672, %v672
        %v721 = vpack.c.bf16 %v717, %v716
        %v722 = vpack.c.bf16 %v719, %v718
        %v723 = vld [vmem:[%s7] sm:$0x1]
        %v725 = vperm.slane %v723, 0
        %v728 = vsel %vm635, %v720, 0
        %730 = vmatpush.bf16.msra.mxu0 0
        %731 = vmatpush.bf16.msra.mxu0 0
        %732 = vmatpush.bf16.msra.mxu0 0
        %733 = vmatpush.bf16.msra.mxu0 0
        %734 = vmatpush.bf16.msra.mxu0 0
        %735 = vmatpush.bf16.msra.mxu0 0
        %736 = vmatpush.bf16.msra.mxu0 %v722
        %737 = vmatpush.bf16.msra.mxu0 %v721
        %738 = vmatmul.bf16.gmra.mxu0 %v728
        %v739 = vpop.f32.mrf.mxu0
        %v740 = vadd.f32 %v725, %v739
        %v741 = vpop.f32.mrf.mxu0
        %742 = vdwg.mxu0
        %v743 = vld [vmem:[#allocation11] sm:$0xff]
        %v744 = vld [vmem:[#allocation11 + $0x8] sm:$0xff]
        %v745 = vld [vmem:[#allocation11 + $0x10] sm:$0xff]
        %v746 = vld [vmem:[#allocation11 + $0x18] sm:$0xff]
        %v747 = vpack.c.bf16 %v715, %v715
        %v748 = vpack.c.bf16 %v744, %v743
        %v749 = vpack.c.bf16 %v746, %v745
        %v750 = vld [vmem:[%s9] sm:$0x1]
        %v752 = vperm.slane %v750, 0
        %v755 = vsel %vm635, %v747, 0
        %757 = vmatpush.bf16.msra.mxu0 0
        %758 = vmatpush.bf16.msra.mxu0 0
        %759 = vmatpush.bf16.msra.mxu0 0
        %760 = vmatpush.bf16.msra.mxu0 0
        %761 = vmatpush.bf16.msra.mxu0 0
        %762 = vmatpush.bf16.msra.mxu0 0
        %763 = vmatpush.bf16.msra.mxu0 %v749
        %764 = vmatpush.bf16.msra.mxu0 %v748
        %765 = vmatmul.bf16.gmra.mxu0 %v755
        %v766 = vpop.f32.mrf.mxu0
        %v767 = vadd.f32 %v752, %v766
        %v768 = vpop.f32.mrf.mxu0
        %769 = vdwg.mxu0
        %v770 = vmul.f32 %v740, 0.35355338
        %v771 = vpack.c.bf16 %v770, %v770
        %v772 = vpack.c.bf16 %v767, %v767
        %vm773 = vcmask 64512
        %v775 = vsel %vm773, %v771, 0
        %v778 = vsel %vm773, %v772, 0
        %780 = vmatpush.bf16.xpose.msra.mxu0 0
        %781 = vmatpush.bf16.xpose.msra.mxu0 0
        %782 = vmatpush.bf16.xpose.msra.mxu0 0
        %783 = vmatpush.bf16.xpose.msra.mxu0 0
        %784 = vmatpush.bf16.xpose.msra.mxu0 0
        %785 = vmatpush.bf16.xpose.msra.mxu0 0
        %786 = vmatpush.bf16.xpose.msra.mxu0 0
        %787 = vmatpush.bf16.xpose.msra.mxu0 %v778
        %788 = vmatmul.bf16.gmra.mxu0 %v775
        %v789 = vpop.f32.mrf.mxu0
        %v790 = vadd.f32 0.0, %v789
        %v791 = vpop.f32.mrf.mxu0
        %792 = vdwg.mxu0
        %vm793 = vcmask 31744
        %v794 = vsel %vm793, %v790, -inf
        %795 = vmax.xlane.f32.xlu0 %v794
        %v796 = vpop.xlane.xlu0 %795
        %v797 = vsub.f32 %v790, %v796
        %v798 = vmul.f32 %v797, 1.442695
        %v799 = vpow.pop %v798
        %v800 = vsel %vm793, %v799, 0.0
        %801 = vadd.xlane.f32.xlu0 %v800
        %v802 = vpop.xlane.xlu0 %801
        %v803 = vrcp.pop %v802
        %v804 = vmul.f32 %v799, %v803
        %v805 = vpack.c.bf16 %v804, %v804
        %807 = vrot.lane.b32.xlu0 %v772, 96
        %v808 = vpop.permute.xlu0 %807
        %v810 = vsel %vm793, %v805, 0
        %vm812 = vcmask 1041408
        %v814 = vsel %vm812, %v808, 0
        %816 = vmatpush.bf16.msra.mxu0 0
        %817 = vmatpush.bf16.msra.mxu0 0
        %818 = vmatpush.bf16.msra.mxu0 0
        %819 = vmatpush.bf16.msra.mxu0 0
        %820 = vmatpush.bf16.msra.mxu0 0
        %821 = vmatpush.bf16.msra.mxu0 0
        %822 = vmatpush.bf16.msra.mxu0 0
        %823 = vmatpush.bf16.msra.mxu0 %v814
        %824 = vmatmul.bf16.gmra.mxu0 %v810
        %v825 = vpop.f32.mrf.mxu0
        %v826 = vadd.f32 0.0, %v825
        %v827 = vpop.f32.mrf.mxu0
        %828 = vdwg.mxu0
        %829 = vst.msk [vmem:[#allocation2] sm:$0xff] %vm773, %v826
        %831 = vrot.lane.b32.xlu0 %v771, 120
        %v832 = vpop.permute.xlu0 %831
        %833 = vrot.lane.b32.xlu0 %v772, 120
        %v834 = vpop.permute.xlu0 %833
        %v836 = vsel %vm773, %v832, 0
        %v839 = vsel %vm773, %v834, 0
        %841 = vmatpush.bf16.xpose.msra.mxu0 0
        %842 = vmatpush.bf16.xpose.msra.mxu0 0
        %843 = vmatpush.bf16.xpose.msra.mxu0 0
        %844 = vmatpush.bf16.xpose.msra.mxu0 0
        %845 = vmatpush.bf16.xpose.msra.mxu0 0
        %846 = vmatpush.bf16.xpose.msra.mxu0 0
        %847 = vmatpush.bf16.xpose.msra.mxu0 0
        %848 = vmatpush.bf16.xpose.msra.mxu0 %v839
        %849 = vmatmul.bf16.gmra.mxu0 %v836
        %v850 = vpop.f32.mrf.mxu0
        %v851 = vadd.f32 0.0, %v850
        %v852 = vpop.f32.mrf.mxu0
        %853 = vdwg.mxu0
        %v854 = vsel %vm793, %v851, -inf
        %855 = vmax.xlane.f32.xlu0 %v854
        %v856 = vpop.xlane.xlu0 %855
        %v857 = vsub.f32 %v851, %v856
        %v858 = vmul.f32 %v857, 1.442695
        %v859 = vpow.pop %v858
        %v860 = vsel %vm793, %v859, 0.0
        %861 = vadd.xlane.f32.xlu0 %v860
        %v862 = vpop.xlane.xlu0 %861
        %v863 = vrcp.pop %v862
        %v864 = vmul.f32 %v859, %v863
        %v865 = vpack.c.bf16 %v864, %v864
        %866 = vrot.lane.b32.xlu0 %v772, 88
        %v867 = vpop.permute.xlu0 %866
        %v869 = vsel %vm793, %v865, 0
        %v872 = vsel %vm812, %v867, 0
        %874 = vmatpush.bf16.msra.mxu0 0
        %875 = vmatpush.bf16.msra.mxu0 0
        %876 = vmatpush.bf16.msra.mxu0 0
        %877 = vmatpush.bf16.msra.mxu0 0
        %878 = vmatpush.bf16.msra.mxu0 0
        %879 = vmatpush.bf16.msra.mxu0 0
        %880 = vmatpush.bf16.msra.mxu0 0
        %881 = vmatpush.bf16.msra.mxu0 %v872
        %882 = vmatmul.bf16.gmra.mxu0 %v869
        %v883 = vpop.f32.mrf.mxu0
        %v884 = vadd.f32 0.0, %v883
        %v885 = vpop.f32.mrf.mxu0
        %886 = vdwg.mxu0
        %888 = vrot.lane.b32.xlu0 %v884, 8
        %v889 = vpop.permute.xlu0 %888
        %vm891 = vcmask 130112
        %892 = vst.msk [vmem:[#allocation2] sm:$0xff] %vm891, %v889
        %893 = vrot.lane.b32.xlu0 %v771, 112
        %v894 = vpop.permute.xlu0 %893
        %895 = vrot.lane.b32.xlu0 %v772, 112
        %v896 = vpop.permute.xlu0 %895
        %v898 = vsel %vm773, %v894, 0
        %v901 = vsel %vm773, %v896, 0
        %903 = vmatpush.bf16.xpose.msra.mxu0 0
        %904 = vmatpush.bf16.xpose.msra.mxu0 0
        %905 = vmatpush.bf16.xpose.msra.mxu0 0
        %906 = vmatpush.bf16.xpose.msra.mxu0 0
        %907 = vmatpush.bf16.xpose.msra.mxu0 0
        %908 = vmatpush.bf16.xpose.msra.mxu0 0
        %909 = vmatpush.bf16.xpose.msra.mxu0 0
        %910 = vmatpush.bf16.xpose.msra.mxu0 %v901
        %911 = vmatmul.bf16.gmra.mxu0 %v898
        %v912 = vpop.f32.mrf.mxu0
        %v913 = vadd.f32 0.0, %v912
        %v914 = vpop.f32.mrf.mxu0
        %915 = vdwg.mxu0
        %v916 = vsel %vm793, %v913, -inf
        %917 = vmax.xlane.f32.xlu0 %v916
        %v918 = vpop.xlane.xlu0 %917
        %v919 = vsub.f32 %v913, %v918
        %v920 = vmul.f32 %v919, 1.442695
        %v921 = vpow.pop %v920
        %v922 = vsel %vm793, %v921, 0.0
        %923 = vadd.xlane.f32.xlu0 %v922
        %v924 = vpop.xlane.xlu0 %923
        %v925 = vrcp.pop %v924
        %v926 = vmul.f32 %v921, %v925
        %v927 = vpack.c.bf16 %v926, %v926
        %928 = vrot.lane.b32.xlu0 %v772, 80
        %v929 = vpop.permute.xlu0 %928
        %v931 = vsel %vm793, %v927, 0
        %v934 = vsel %vm812, %v929, 0
        %936 = vmatpush.bf16.msra.mxu0 0
        %937 = vmatpush.bf16.msra.mxu0 0
        %938 = vmatpush.bf16.msra.mxu0 0
        %939 = vmatpush.bf16.msra.mxu0 0
        %940 = vmatpush.bf16.msra.mxu0 0
        %941 = vmatpush.bf16.msra.mxu0 0
        %942 = vmatpush.bf16.msra.mxu0 0
        %943 = vmatpush.bf16.msra.mxu0 %v934
        %944 = vmatmul.bf16.gmra.mxu0 %v931
        %v945 = vpop.f32.mrf.mxu0
        %v946 = vadd.f32 0.0, %v945
        %v947 = vpop.f32.mrf.mxu0
        %948 = vdwg.mxu0
        %950 = vrot.lane.b32.xlu0 %v946, 16
        %v951 = vpop.permute.xlu0 %950
        %vm953 = vcmask 195712
        %954 = vst.msk [vmem:[#allocation2] sm:$0xff] %vm953, %v951
        %955 = vrot.lane.b32.xlu0 %v771, 104
        %v956 = vpop.permute.xlu0 %955
        %957 = vrot.lane.b32.xlu0 %v772, 104
        %v958 = vpop.permute.xlu0 %957
        %v960 = vsel %vm773, %v956, 0
        %v963 = vsel %vm773, %v958, 0
        %965 = vmatpush.bf16.xpose.msra.mxu0 0
        %966 = vmatpush.bf16.xpose.msra.mxu0 0
        %967 = vmatpush.bf16.xpose.msra.mxu0 0
        %968 = vmatpush.bf16.xpose.msra.mxu0 0
        %969 = vmatpush.bf16.xpose.msra.mxu0 0
        %970 = vmatpush.bf16.xpose.msra.mxu0 0
        %971 = vmatpush.bf16.xpose.msra.mxu0 0
        %972 = vmatpush.bf16.xpose.msra.mxu0 %v963
        %973 = vmatmul.bf16.gmra.mxu0 %v960
        %v974 = vpop.f32.mrf.mxu0
        %v975 = vadd.f32 0.0, %v974
        %v976 = vpop.f32.mrf.mxu0
        %977 = vdwg.mxu0
        %v978 = vsel %vm793, %v975, -inf
        %979 = vmax.xlane.f32.xlu0 %v978
        %v980 = vpop.xlane.xlu0 %979
        %v981 = vsub.f32 %v975, %v980
        %v982 = vmul.f32 %v981, 1.442695
        %v983 = vpow.pop %v982
        %v984 = vsel %vm793, %v983, 0.0
        %985 = vadd.xlane.f32.xlu0 %v984
        %v986 = vpop.xlane.xlu0 %985
        %v987 = vrcp.pop %v986
        %v988 = vmul.f32 %v983, %v987
        %v989 = vpack.c.bf16 %v988, %v988
        %990 = vrot.lane.b32.xlu0 %v772, 72
        %v991 = vpop.permute.xlu0 %990
        %v993 = vsel %vm793, %v989, 0
        %v996 = vsel %vm812, %v991, 0
        %998 = vmatpush.bf16.msra.mxu0 0
        %999 = vmatpush.bf16.msra.mxu0 0
        %1000 = vmatpush.bf16.msra.mxu0 0
        %1001 = vmatpush.bf16.msra.mxu0 0
        %1002 = vmatpush.bf16.msra.mxu0 0
        %1003 = vmatpush.bf16.msra.mxu0 0
        %1004 = vmatpush.bf16.msra.mxu0 0
        %1005 = vmatpush.bf16.msra.mxu0 %v996
        %1006 = vmatmul.bf16.gmra.mxu0 %v993
        %v1007 = vpop.f32.mrf.mxu0
        %v1008 = vadd.f32 0.0, %v1007
        %v1009 = vpop.f32.mrf.mxu0
        %1010 = vdwg.mxu0
        %1012 = vrot.lane.b32.xlu0 %v1008, 24
        %v1013 = vpop.permute.xlu0 %1012
        %vm1015 = vcmask 261312
        %1016 = vst.msk [vmem:[#allocation2] sm:$0xff] %vm1015, %v1013
        %v1017 = vld [vmem:[#allocation2] sm:$0xff]
        %v1018 = vld [vmem:[#allocation12] sm:$0xff]
        %v1019 = vld [vmem:[#allocation12 + $0x8] sm:$0xff]
        %v1020 = vld [vmem:[#allocation12 + $0x10] sm:$0xff]
        %v1021 = vld [vmem:[#allocation12 + $0x18] sm:$0xff]
        %v1022 = vpack.c.bf16 %v1017, %v1017
        %v1023 = vpack.c.bf16 %v1019, %v1018
        %v1024 = vpack.c.bf16 %v1021, %v1020
        %v1025 = vld [vmem:[%s11] sm:$0x1]
        %v1027 = vperm.slane %v1025, 0
        %v1030 = vsel %vm635, %v1022, 0
        %1032 = vmatpush.bf16.msra.mxu0 0
        %1033 = vmatpush.bf16.msra.mxu0 0
        %1034 = vmatpush.bf16.msra.mxu0 0
        %1035 = vmatpush.bf16.msra.mxu0 0
        %1036 = vmatpush.bf16.msra.mxu0 0
        %1037 = vmatpush.bf16.msra.mxu0 0
        %1038 = vmatpush.bf16.msra.mxu0 %v1024
        %1039 = vmatpush.bf16.msra.mxu0 %v1023
        %1040 = vmatmul.bf16.gmra.mxu0 %v1030
        %v1041 = vpop.f32.mrf.mxu0
        %v1042 = vadd.f32 %v1027, %v1041
        %v1043 = vpop.f32.mrf.mxu0
        %1044 = vdwg.mxu0
        %v1045 = vadd.f32 %v1042, %v672
        %v1046 = vsel %vm635, %v1045, 0.0
        %1047 = vadd.xlane.f32.xlu0 %v1046
        %v1048 = vpop.xlane.xlu0 %1047
        %v1049 = vmul.f32 %v1048, %v645
        %v1050 = vsub.f32 %v1045, %v1049
        %v1051 = vmul.f32 %v1050, %v1050
        %v1052 = vsel %vm635, %v1051, 0.0
        %1053 = vadd.xlane.f32.xlu0 %v1052
        %v1054 = vpop.xlane.xlu0 %1053
        %v1055 = vmul.f32 %v1054, %v645
        %v1056 = vadd.f32 %v1055, 1e-05
        %v1057 = vrsqrt.pop %v1056
        %v1058 = vmul.f32 %v1057, %v1056
        %v1059 = vmul.f32 %v1058, %v1057
        %v1060 = vmul.f32 0.5, %v1059
        %v1061 = vsub.f32 1.5, %v1060
        %v1062 = vmul.f32 %v1057, %v1061
        %vm1063 = vweird.f32 %v1056
        %vm1064 = vweird.f32 %v1057
        %vm1065 = vmor %vm1063, %vm1064
        %v1066 = vsel %vm1065, %v1057, %v1062
        %v1067 = vmul.f32 %v1050, %v1066
        %v1068 = vmul.f32 %v1067, %v666
        %v1069 = vadd.f32 %v1068, %v670
        %v1070 = vld [vmem:[#allocation14] sm:$0xff]
        %v1071 = vld [vmem:[#allocation14 + $0x8] sm:$0xff]
        %v1072 = vld [vmem:[#allocation14 + $0x10] sm:$0xff]
        %v1073 = vld [vmem:[#allocation14 + $0x18] sm:$0xff]
        %v1074 = vpack.c.bf16 %v1069, %v1069
        %v1075 = vpack.c.bf16 %v1071, %v1070
        %v1076 = vpack.c.bf16 %v1073, %v1072
        %v1077 = vld [vmem:[%s13] sm:$0x1]
        %v1079 = vperm.slane %v1077, 0
        %v1082 = vsel %vm635, %v1074, 0
        %1084 = vmatpush.bf16.msra.mxu0 0
        %1085 = vmatpush.bf16.msra.mxu0 0
        %1086 = vmatpush.bf16.msra.mxu0 0
        %1087 = vmatpush.bf16.msra.mxu0 0
        %1088 = vmatpush.bf16.msra.mxu0 0
        %1089 = vmatpush.bf16.msra.mxu0 0
        %1090 = vmatpush.bf16.msra.mxu0 %v1076
        %1091 = vmatpush.bf16.msra.mxu0 %v1075
        %1092 = vmatmul.bf16.gmra.mxu0 %v1082
        %v1093 = vpop.f32.mrf.mxu0
        %v1094 = vadd.f32 %v1079, %v1093
        %v1095 = vpop.f32.mrf.mxu0
        %1096 = vdwg.mxu0
        %v1097 = vmul.f32 %v1094, 0.5
        %v1098 = vmul.f32 %v1094, 0.044715
        %v1099 = vmul.f32 %v1098, %v1094
        %v1100 = vmul.f32 %v1099, %v1094
        %v1101 = vadd.f32 %v1094, %v1100
        %v1102 = vmul.f32 %v1101, 0.7978846
        %v1103 = vtanh.pop %v1102
        %v1104 = vadd.f32 %v1103, 1.0
        %v1105 = vmul.f32 %v1097, %v1104
        %v1106 = vadd.f32 %v1105, %v1069
        %1107 = vst.msk [vmem:[%s605] sm:$0xff] %vm635, %v1106
        %s1108 = sand.u32 %s348, 1
        %s1109 = scalar_lea.sflag [#allocation5], %s1108
        %s1110 = sand.u32 %s348, 1
        %s1111 = smul.addr %s1110, 8
        %s1112 = scalar_lea.vmem [#allocation15], %s1111
        // Predicated region
        $region105: #{tpu_custom_call.1} parent=75 // pred_check
          %p1113 = pneg %p358
        $region106: #{tpu_custom_call.1} parent=75 // pred_check_branch
          %1115 = sbr.rel (%p1113) target = $region108
        $region107: #{tpu_custom_call.1} parent=75 // pred_region
          %1117 = vsyncadd %s1109, 0
          %s1118 = smul.addr %s36, 8
          %s1119 = scalar_lea.hbm %s14, %s1118
          %s1121 = sshll.u32 %s1112, 4
          %s1122 = int_to_ptr.vmem [resolvable:$true] %s1121
          %s1123 = sshll.u32 %s1119, 4
          %s1124 = int_to_ptr.hbm [resolvable:$true] %s1123
          %1126 = dma.vmem_to_hbm [thread:$0]  %s1122, 128, %s1124, %s1109
        $region108: #{tpu_custom_call.1} parent=75 // pred_fallthru
          _
      $region76: #{tpu_custom_call.1} parent=5 // pred_fallthru
        _
      %p1127 = scmp.le.s32.totalorder 2, %s31
      // Predicated region
      $region109: #{tpu_custom_call.1} parent=5 // pred_check
        %p1128 = pneg %p1127
      $region110: #{tpu_custom_call.1} parent=5 // pred_check_branch
        %1130 = sbr.rel (%p1128) target = $region112
      $region111: #{tpu_custom_call.1} parent=5 // pred_region
        %s1131 = ssub.s32 %s31, 2
        // Predicated region
        $region113: #{tpu_custom_call.1} parent=111 // pred_check
          %p1132 = pneg %p364
        $region114: #{tpu_custom_call.1} parent=111 // pred_check_branch
          %1134 = sbr.rel (%p1132) target = $region116
        $region115: #{tpu_custom_call.1} parent=111 // pred_region
          %s1135 = sand.u32 %s349, 1
          %s1136 = scalar_lea.sflag [#allocation5], %s1135
          %s1137 = sand.u32 %s349, 1
          %s1138 = smul.addr %s1137, 8
          %s1139 = scalar_lea.vmem [#allocation15], %s1138
          %1141 = dma.done %s1136, 128
        $region116: #{tpu_custom_call.1} parent=111 // pred_fallthru
          _
      $region112: #{tpu_custom_call.1} parent=5 // pred_fallthru
        _
    $region6: #{tpu_custom_call.1} parent=1 // loop_footer
      %s35 = sadd.s32 1, %s31
    $region7: #{tpu_custom_call.1} parent=1 // loop_footer_branch
      %30 = sbr.rel target = $region3
    $region8: #{tpu_custom_call.1} parent=1 // loop_exit
      _
    %1142 = vsyncpa [#allocation4], 1
    %s1143 = scalar_lea.sflag [#allocation4], 1
    %1144 = vsyncpa %s1143, 1
    %1145 = vsyncpa [#allocation7], 1
    %s1146 = scalar_lea.sflag [#allocation7], 1
    %1147 = vsyncpa %s1146, 1
    %1148 = vsyncpa [#allocation10], 1
    %1149 = vsyncpa [#allocation13], 1
    %1150 = vsyncpa [#allocation5], 1
    %s1151 = scalar_lea.sflag [#allocation5], 1
    %1152 = vsyncpa %s1151, 1

</llo_original>
